<compile_context>
chip_gen: v6e
topology: v6e:2x2x1
jax: 0.10.0
libtpu: 0.0.40
codegen_flags: <defaults>
</compile_context>

<pallas_src>
import jax
import jax.numpy as jnp
from jax import lax
from jax.experimental import pallas as pl
from jax.experimental.pallas import tpu as pltpu

KSIZE = 3
PAD = 1
NEG_SLOPE = 0.01     # nn.LeakyReLU default negative_slope
BN_EPS = 1e-5        # nn.BatchNorm3d default eps
LANE = 128
SUBLANE = 8


def _round_up(x, m):
    return (x + m - 1) // m * m


def _phys_bytes(shape, dtype):
    """VMEM footprint of one buffer including Mosaic tiled-layout padding
    (last dim -> multiple of 128 lanes, 2nd-to-last -> 8 * (4/itemsize) sublanes)."""
    itemsize = jnp.dtype(dtype).itemsize
    if len(shape) == 0:
        return 4
    lane = _round_up(int(shape[-1]), LANE)
    sub_tile = SUBLANE * max(1, 4 // itemsize)
    sub = _round_up(int(shape[-2]) if len(shape) >= 2 else 1, sub_tile)
    lead = 1
    for s in shape[:-2]:
        lead *= int(s)
    return lead * sub * lane * itemsize


def _step_vmem_bytes(td, rows_p, kp, cout_p, out_dtype):
    """Per-grid-step VMEM: double-buffered in/out blocks + f32 GEMM result value
    (+ one spare copy of the LHS value in case the merge-reshape materializes)."""
    x_blk = _phys_bytes((1, td, rows_p, kp), jnp.bfloat16)
    o_blk = _phys_bytes((1, td, rows_p, cout_p), out_dtype)
    acc = _phys_bytes((td * rows_p, cout_p), jnp.float32)
    x_val = _phys_bytes((td * rows_p, kp), jnp.bfloat16)
    return 2 * (x_blk + o_blk) + acc + x_val


def _conv_bn_act_kernel(x_ref, w_ref, ss_ref, o_ref):
    """One (batch, D-slab) grid step: fused conv-GEMM + BN + LeakyReLU.

    x_ref : (1, TD, rows_p, kp)      bf16  im2col'd input slab (27 taps folded in K)
    w_ref : (kp, cout_p)             bf16  resident folded weights
    ss_ref: (2, cout_p)              f32   row0 = BN scale, row1 = folded bias+BN shift
    o_ref : (1, TD, rows_p, cout_p)        lane-dense output slab
    """
    _, td, rows_p, kp = x_ref.shape
    x = x_ref[...].reshape(td * rows_p, kp)            # tile-preserving dim merge
    acc = jnp.dot(x, w_ref[...], preferred_element_type=jnp.float32)
    y = acc * ss_ref[0:1, :] + ss_ref[1:2, :]          # conv bias + BN folded
    y = jnp.maximum(y, NEG_SLOPE * y)                  # LeakyReLU(0.01)
    o_ref[...] = y.reshape(o_ref.shape).astype(o_ref.dtype)


def conv_bn_act_layer(x_ndhwc, weight, scale, shift, *, out_dtype=None,
                      vmem_block_budget=24 << 20):
    """One Conv3d(3x3x3, pad 1) -> BatchNorm3d -> LeakyReLU stage (eval mode)."""
    if out_dtype is None:
        out_dtype = x_ndhwc.dtype
    n, d, h, w, c_in = x_ndhwc.shape
    c_out = weight.shape[-1]
    rows = h * w
    rows_p = _round_up(rows, SUBLANE)                  # sublane-aligned M
    k_raw = KSIZE ** 3 * c_in                          # all 27 taps folded into K
    kp = _round_up(k_raw, 2 * SUBLANE)                 # bf16-sublane-aligned K
    cout_p = _round_up(c_out, LANE)                    # lane-dense N / MXU columns

    # --- wrapper-side data movement (plain XLA): zero-pad spatially, interleave
    #     the 27 taps into the channel axis, flatten H*W, pad M/K, cast bf16. ---
    xpad = jnp.pad(x_ndhwc, ((0, 0), (PAD, PAD), (PAD, PAD), (PAD, PAD), (0, 0)))
    taps = [xpad[:, kd:kd + d, kh:kh + h, kw:kw + w, :]
            for kd in range(KSIZE) for kh in range(KSIZE) for kw in range(KSIZE)]
    col = jnp.concatenate(taps, axis=-1).reshape(n, d, rows, k_raw)
    col = jnp.pad(col, ((0, 0), (0, 0), (0, rows_p - rows), (0, kp - k_raw)))
    col = col.astype(jnp.bfloat16)

    wq = weight.reshape(k_raw, c_out)                  # (kd,kh,kw,cin) major -> K
    wq = jnp.pad(wq, ((0, kp - k_raw), (0, cout_p - c_out))).astype(jnp.bfloat16)

    ss = jnp.stack([jnp.pad(scale.astype(jnp.float32), (0, cout_p - c_out)),
                    jnp.pad(shift.astype(jnp.float32), (0, cout_p - c_out))])

    # D-slab size: largest divisor of D whose per-step VMEM footprint fits budget.
    # TODO(synk): for very large H*W an additional H-row-slab grid axis would be
    # needed to stay under the v7x 64 MiB VMEM; not required at these sizes.
    td = 1
    for cand in range(1, d + 1):
        if d % cand == 0 and _step_vmem_bytes(cand, rows_p, kp, cout_p,
                                              out_dtype) <= vmem_block_budget:
            td = cand

    resident = (_phys_bytes((kp, cout_p), jnp.bfloat16)
                + _phys_bytes((2, cout_p), jnp.float32))
    step_bytes = _step_vmem_bytes(td, rows_p, kp, cout_p, out_dtype)
    vmem_limit = int(min(max(step_bytes + resident + (4 << 20), 8 << 20), 48 << 20))

    out_itemsize = jnp.dtype(out_dtype).itemsize
    flops = 2 * n * d * rows * k_raw * cout_p
    bytes_accessed = int(col.size * 2 + wq.size * 2 + ss.size * 4
                         + n * d * rows_p * cout_p * out_itemsize)

    out = pl.pallas_call(
        _conv_bn_act_kernel,
        out_shape=jax.ShapeDtypeStruct((n, d, rows_p, cout_p), out_dtype),
        grid_spec=pltpu.PrefetchScalarGridSpec(
            num_scalar_prefetch=0,
            grid=(n, d // td),
            in_specs=[
                pl.BlockSpec((1, td, rows_p, kp), lambda ni, di: (ni, di, 0, 0)),
                pl.BlockSpec((kp, cout_p), lambda ni, di: (0, 0)),      # resident
                pl.BlockSpec((2, cout_p), lambda ni, di: (0, 0)),       # resident
            ],
            out_specs=pl.BlockSpec((1, td, rows_p, cout_p),
                                   lambda ni, di: (ni, di, 0, 0)),
        ),
        compiler_params=pltpu.CompilerParams(
            dimension_semantics=("parallel", "parallel"),
            vmem_limit_bytes=vmem_limit),
        cost_estimate=pl.CostEstimate(flops=flops, transcendentals=0,
                                      bytes_accessed=bytes_accessed),
    )(col, wq, ss)

    # Strip M / lane padding and restore (N, D, H, W, Cout).
    return out[:, :, :rows, :c_out].reshape(n, d, h, w, c_out)


def make_params(key, in_channels, out_channels, num_conv=2):
    """Deterministic synthetic parameters matching ConvBlock.__init__ shapes."""
    params = []
    c_in = in_channels
    for _ in range(num_conv):
        key, k_w, k_b, k_g, k_be, k_m, k_v = jax.random.split(key, 7)
        params.append(dict(
            weight=0.1 * jax.random.normal(
                k_w, (KSIZE, KSIZE, KSIZE, c_in, out_channels), jnp.float32),
            bias=0.1 * jax.random.normal(k_b, (out_channels,), jnp.float32),
            gamma=1.0 + 0.1 * jax.random.normal(k_g, (out_channels,), jnp.float32),
            beta=0.1 * jax.random.normal(k_be, (out_channels,), jnp.float32),
            mean=0.1 * jax.random.normal(k_m, (out_channels,), jnp.float32),
            var=jax.random.uniform(k_v, (out_channels,), jnp.float32, 0.5, 1.5),
        ))
        c_in = out_channels
    return params


def conv_block_forward(x_ncdhw, params):
    """ConvBlock.forward: num_conv x (Conv3d -> BatchNorm3d -> LeakyReLU -> [Dropout])."""
    # TODO(synk): training-mode BatchNorm (batch statistics) and Dropout RNG are not
    # implemented; this reproduces the eval()-mode forward (Dropout == identity).
    x = jnp.transpose(x_ncdhw, (0, 2, 3, 4, 1))        # NCDHW -> NDHWC
    for i, p in enumerate(params):
        scale = p["gamma"] / jnp.sqrt(p["var"] + BN_EPS)
        shift = p["beta"] + (p["bias"] - p["mean"]) * scale
        # bf16 inter-stage activation halves HBM write+read; final stage in f32.
        out_dtype = jnp.bfloat16 if i < len(params) - 1 else x_ncdhw.dtype
        x = conv_bn_act_layer(x, p["weight"], scale, shift, out_dtype=out_dtype)
    return jnp.transpose(x, (0, 4, 1, 2, 3))           # NDHWC -> NCDHW


def _reference_forward(x_ncdhw, params):
    """Pure-JAX reference (XLA conv, HIGHEST precision) on the same bf16-rounded
    operands the kernel uses, so only MXU accumulation order differs."""
    x = jnp.transpose(x_ncdhw, (0, 2, 3, 4, 1))
    for p in params:
        xb = x.astype(jnp.bfloat16).astype(jnp.float32)
        wb = p["weight"].astype(jnp.bfloat16).astype(jnp.float32)
        y = lax.conv_general_dilated(
            xb, wb, window_strides=(1, 1, 1), padding=((PAD, PAD),) * 3,
            dimension_numbers=("NDHWC", "DHWIO", "NDHWC"),
            precision=lax.Precision.HIGHEST) + p["bias"]
        y = (y - p["mean"]) / jnp.sqrt(p["var"] + BN_EPS) * p["gamma"] + p["beta"]
        x = jnp.maximum(y, NEG_SLOPE * y)
    return jnp.transpose(x, (0, 4, 1, 2, 3))


if __name__ == "__main__":
    key = jax.random.PRNGKey(0)
    k_x, k_p = jax.random.split(key)

    N, C_IN, C_OUT, D, H, W = 2, 4, 8, 8, 8, 8
    x = jax.random.normal(k_x, (N, C_IN, D, H, W), jnp.float32)   # PyTorch NCDHW
    params = make_params(k_p, C_IN, C_OUT, num_conv=2)

    out = jax.jit(conv_block_forward)(x, params)
    out = jax.block_until_ready(out)

    assert out.shape == (N, C_OUT, D, H, W)
    assert bool(jnp.isfinite(out).all())

    ref = _reference_forward(x, params)
    max_err = float(jnp.max(jnp.abs(out - ref)))
    assert max_err < 3e-2, f"mismatch vs reference, max abs err = {max_err}"

    print("KERNEL_OK")
</pallas_src>

<mosaic_0001>
module attributes {stable_mosaic.version = 11 : i64} {
  func.func @_conv_bn_act_kernel(%arg0: i32, %arg1: i32, %arg2: memref<1x8x64x112xbf16, #tpu.memory_space<vmem>>, %arg3: memref<112x128xbf16, #tpu.memory_space<vmem>>, %arg4: memref<2x128xf32, #tpu.memory_space<vmem>>, %arg5: memref<1x8x64x128xbf16, #tpu.memory_space<vmem>>) attributes {dimension_semantics = [#tpu.dimension_semantics<parallel>, #tpu.dimension_semantics<parallel>], iteration_bounds = array<i64: 2, 1>, scalar_prefetch = 0 : i64, scratch_operands = 0 : i64, tpu.core_type = #tpu.core_type<tc>, window_params = [{transform_indices = @transform_0, window_bounds = array<i64: 1, 8, 64, 112>}, {pipeline_mode = #tpu.pipeline_mode<synchronous>, transform_indices = @transform_1, window_bounds = array<i64: 112, 128>}, {pipeline_mode = #tpu.pipeline_mode<synchronous>, transform_indices = @transform_2, window_bounds = array<i64: 2, 128>}, {transform_indices = @transform_3, window_bounds = array<i64: 1, 8, 64, 128>}]} {
    %c0 = arith.constant 0 : index
    %c0_0 = arith.constant 0 : index
    %c0_1 = arith.constant 0 : index
    %c0_2 = arith.constant 0 : index
    %0 = vector.load %arg2[%c0, %c0_0, %c0_1, %c0_2] : memref<1x8x64x112xbf16, #tpu.memory_space<vmem>>, vector<1x8x64x112xbf16>
    %1 = vector.shape_cast %0 : vector<1x8x64x112xbf16> to vector<512x112xbf16>
    %c0_3 = arith.constant 0 : index
    %c0_4 = arith.constant 0 : index
    %2 = vector.load %arg3[%c0_3, %c0_4] : memref<112x128xbf16, #tpu.memory_space<vmem>>, vector<112x128xbf16>
    %cst = arith.constant dense<0.000000e+00> : vector<512x128xf32>
    %3 = tpu.matmul %1, %2, %cst {dimension_numbers = #tpu.dot_dimension_numbers<[1], [0], [0], [1], [0, 0, 1, 1], [], []>} : vector<512x112xbf16>, vector<112x128xbf16>, vector<512x128xf32> -> vector<512x128xf32>
    %c0_5 = arith.constant 0 : index
    %c0_6 = arith.constant 0 : index
    %4 = vector.load %arg4[%c0_5, %c0_6] : memref<2x128xf32, #tpu.memory_space<vmem>>, vector<1x128xf32>
    %5 = vector.broadcast %4 : vector<1x128xf32> to vector<512x128xf32>
    %6 = arith.mulf %3, %5 : vector<512x128xf32>
    %c1 = arith.constant 1 : index
    %c0_7 = arith.constant 0 : index
    %7 = vector.load %arg4[%c1, %c0_7] : memref<2x128xf32, #tpu.memory_space<vmem>>, vector<1x128xf32>
    %8 = vector.broadcast %7 : vector<1x128xf32> to vector<512x128xf32>
    %9 = arith.addf %6, %8 : vector<512x128xf32>
    %cst_8 = arith.constant 0.00999999977 : f32
    %10 = vector.broadcast %cst_8 : f32 to vector<512x128xf32>
    %11 = arith.mulf %10, %9 : vector<512x128xf32>
    %12 = arith.maximumf %9, %11 : vector<512x128xf32>
    %13 = vector.shape_cast %12 : vector<512x128xf32> to vector<1x8x64x128xf32>
    %14 = arith.truncf %13 : vector<1x8x64x128xf32> to vector<1x8x64x128xbf16>
    %c0_9 = arith.constant 0 : index
    %c0_10 = arith.constant 0 : index
    %c0_11 = arith.constant 0 : index
    %c0_12 = arith.constant 0 : index
    %15 = vector.load %arg5[%c0_9, %c0_10, %c0_11, %c0_12] : memref<1x8x64x128xbf16, #tpu.memory_space<vmem>>, vector<1x8x64x128xbf16>
    tpu.vector_store %arg5[%c0_9, %c0_10, %c0_11, %c0_12], %14 {strides = array<i32>} : memref<1x8x64x128xbf16, #tpu.memory_space<vmem>>, vector<1x8x64x128xbf16>,
    return
  }
  func.func @transform_0(%arg0: i32, %arg1: i32) -> (i32, i32, i32, i32) {
    %c0_i32 = arith.constant 0 : i32
    %c0_i32_0 = arith.constant 0 : i32
    %c0_i32_1 = arith.constant 0 : i32
    return %arg0, %arg1, %c0_i32, %c0_i32_0 : i32, i32, i32, i32
  }
  func.func @transform_1(%arg0: i32, %arg1: i32) -> (i32, i32) {
    %c0_i32 = arith.constant 0 : i32
    %c0_i32_0 = arith.constant 0 : i32
    %c0_i32_1 = arith.constant 0 : i32
    return %c0_i32, %c0_i32_0 : i32, i32
  }
  func.func @transform_2(%arg0: i32, %arg1: i32) -> (i32, i32) {
    %c0_i32 = arith.constant 0 : i32
    %c0_i32_0 = arith.constant 0 : i32
    %c0_i32_1 = arith.constant 0 : i32
    return %c0_i32, %c0_i32_0 : i32, i32
  }
  func.func @transform_3(%arg0: i32, %arg1: i32) -> (i32, i32, i32, i32) {
    %c0_i32 = arith.constant 0 : i32
    %c0_i32_0 = arith.constant 0 : i32
    %c0_i32_1 = arith.constant 0 : i32
    return %arg0, %arg1, %c0_i32, %c0_i32_0 : i32, i32, i32, i32
  }
}

module attributes {stable_mosaic.version = 11 : i64} {
  func.func @_conv_bn_act_kernel(%arg0: i32, %arg1: i32, %arg2: memref<1x8x64x224xbf16, #tpu.memory_space<vmem>>, %arg3: memref<224x128xbf16, #tpu.memory_space<vmem>>, %arg4: memref<2x128xf32, #tpu.memory_space<vmem>>, %arg5: memref<1x8x64x128xf32, #tpu.memory_space<vmem>>) attributes {dimension_semantics = [#tpu.dimension_semantics<parallel>, #tpu.dimension_semantics<parallel>], iteration_bounds = array<i64: 2, 1>, scalar_prefetch = 0 : i64, scratch_operands = 0 : i64, tpu.core_type = #tpu.core_type<tc>, window_params = [{transform_indices = @transform_0, window_bounds = array<i64: 1, 8, 64, 224>}, {pipeline_mode = #tpu.pipeline_mode<synchronous>, transform_indices = @transform_1, window_bounds = array<i64: 224, 128>}, {pipeline_mode = #tpu.pipeline_mode<synchronous>, transform_indices = @transform_2, window_bounds = array<i64: 2, 128>}, {transform_indices = @transform_3, window_bounds = array<i64: 1, 8, 64, 128>}]} {
    %c0 = arith.constant 0 : index
    %c0_0 = arith.constant 0 : index
    %c0_1 = arith.constant 0 : index
    %c0_2 = arith.constant 0 : index
    %0 = vector.load %arg2[%c0, %c0_0, %c0_1, %c0_2] : memref<1x8x64x224xbf16, #tpu.memory_space<vmem>>, vector<1x8x64x224xbf16>
    %1 = vector.shape_cast %0 : vector<1x8x64x224xbf16> to vector<512x224xbf16>
    %c0_3 = arith.constant 0 : index
    %c0_4 = arith.constant 0 : index
    %2 = vector.load %arg3[%c0_3, %c0_4] : memref<224x128xbf16, #tpu.memory_space<vmem>>, vector<224x128xbf16>
    %cst = arith.constant dense<0.000000e+00> : vector<512x128xf32>
    %3 = tpu.matmul %1, %2, %cst {dimension_numbers = #tpu.dot_dimension_numbers<[1], [0], [0], [1], [0, 0, 1, 1], [], []>} : vector<512x224xbf16>, vector<224x128xbf16>, vector<512x128xf32> -> vector<512x128xf32>
    %c0_5 = arith.constant 0 : index
    %c0_6 = arith.constant 0 : index
    %4 = vector.load %arg4[%c0_5, %c0_6] : memref<2x128xf32, #tpu.memory_space<vmem>>, vector<1x128xf32>
    %5 = vector.broadcast %4 : vector<1x128xf32> to vector<512x128xf32>
    %6 = arith.mulf %3, %5 : vector<512x128xf32>
    %c1 = arith.constant 1 : index
    %c0_7 = arith.constant 0 : index
    %7 = vector.load %arg4[%c1, %c0_7] : memref<2x128xf32, #tpu.memory_space<vmem>>, vector<1x128xf32>
    %8 = vector.broadcast %7 : vector<1x128xf32> to vector<512x128xf32>
    %9 = arith.addf %6, %8 : vector<512x128xf32>
    %cst_8 = arith.constant 0.00999999977 : f32
    %10 = vector.broadcast %cst_8 : f32 to vector<512x128xf32>
    %11 = arith.mulf %10, %9 : vector<512x128xf32>
    %12 = arith.maximumf %9, %11 : vector<512x128xf32>
    %13 = vector.shape_cast %12 : vector<512x128xf32> to vector<1x8x64x128xf32>
    %c0_9 = arith.constant 0 : index
    %c0_10 = arith.constant 0 : index
    %c0_11 = arith.constant 0 : index
    %c0_12 = arith.constant 0 : index
    %14 = vector.load %arg5[%c0_9, %c0_10, %c0_11, %c0_12] : memref<1x8x64x128xf32, #tpu.memory_space<vmem>>, vector<1x8x64x128xf32>
    tpu.vector_store %arg5[%c0_9, %c0_10, %c0_11, %c0_12], %13 {strides = array<i32>} : memref<1x8x64x128xf32, #tpu.memory_space<vmem>>, vector<1x8x64x128xf32>,
    return
  }
  func.func @transform_0(%arg0: i32, %arg1: i32) -> (i32, i32, i32, i32) {
    %c0_i32 = arith.constant 0 : i32
    %c0_i32_0 = arith.constant 0 : i32
    %c0_i32_1 = arith.constant 0 : i32
    return %arg0, %arg1, %c0_i32, %c0_i32_0 : i32, i32, i32, i32
  }
  func.func @transform_1(%arg0: i32, %arg1: i32) -> (i32, i32) {
    %c0_i32 = arith.constant 0 : i32
    %c0_i32_0 = arith.constant 0 : i32
    %c0_i32_1 = arith.constant 0 : i32
    return %c0_i32, %c0_i32_0 : i32, i32
  }
  func.func @transform_2(%arg0: i32, %arg1: i32) -> (i32, i32) {
    %c0_i32 = arith.constant 0 : i32
    %c0_i32_0 = arith.constant 0 : i32
    %c0_i32_1 = arith.constant 0 : i32
    return %c0_i32, %c0_i32_0 : i32, i32
  }
  func.func @transform_3(%arg0: i32, %arg1: i32) -> (i32, i32, i32, i32) {
    %c0_i32 = arith.constant 0 : i32
    %c0_i32_0 = arith.constant 0 : i32
    %c0_i32_1 = arith.constant 0 : i32
    return %arg0, %arg1, %c0_i32, %c0_i32_0 : i32, i32, i32, i32
  }
}

</mosaic_0001>

<llo_original>
// kernel: conv_block_forward.2
$region0: #{conv_block_forward.2}
  #allocation0 [shape = 'u32[]', space=smem, size = 0x4, offset = 0x4, fixed_abs, tag = 'smem constant byte address 0x4 - core index']
  #allocation1 [shape = 'u32[144,128]{1,0:T(1,128)}', space=vmem, size = 0x12000, scoped, tag = 'internal scratch']
  %s0 = inlined_call_operand.vmem [shape: bf16[2,8,64,112], index: 0, kind: input, shape index: {}]
  %s1 = inlined_call_operand.vmem [shape: bf16[112,128], index: 1, kind: input, shape index: {}]
  %s2 = inlined_call_operand.vmem [shape: f32[2,128], index: 2, kind: input, shape index: {}]
  %s3 = inlined_call_operand.vmem [shape: bf16[2,8,64,128], index: 3, kind: output, shape index: {}]
  %s4 = sld [smem:[#allocation0]]
  $region45: #{conv_block_forward.2} parent=0
    _
  %s6 = ssub.s32 1, %s4
  %s7 = scalar_select 0, %s6, %s4
  loop: start=0, step=1, limit=4
  $region2: #{conv_block_forward.2} parent=0 // loop_pre_header
    _
  $region3: #{conv_block_forward.2} parent=0 // loop_header
    %s9 = sphi 0, %s13
    %p10 = scmp.ge.s32.totalorder %s9, 4
    %s16 = sphi 0, %s28
    %s17 = sphi 0, %s24
    %s18 = sphi 0, %s16
    %s19 = sphi 0, %s17
    %s20 = sphi 0, %s18
    %s21 = sphi 0, %s19
    %s33 = sphi 0, %s35
    %s36 = sphi 0, %s33
    %s37 = sphi 0, %s36
    %s53 = sphi 0, %s37
    %s57 = sphi 0, %s57
    %s59 = sphi 0, %s57
    %s60 = sphi 0, %s59
    %s74 = sphi 0, %s60
    %s78 = sphi 0, %s78
    %s80 = sphi 0, %s78
    %s81 = sphi 0, %s80
    %s95 = sphi 0, %s81
    %s103 = sphi 0, %s105
    %s106 = sphi 0, %s103
    %s107 = sphi 0, %s106
    %s123 = sphi 0, %s107
  $region4: #{conv_block_forward.2} parent=0 // loop_header_branch
    %12 = sbr.rel (%p10) target = $region8
  $region5: #{conv_block_forward.2} parent=0 // loop_body
    %s14 = ssub.s32 %s9, 1
    %s15 = ssub.s32 %s9, 2
    %s22 = sadd.s32 1, %s17
    %p23 = scmp.ge.s32.totalorder %s22, 1
    %s24 = scalar_select %p23, 0, %s22
    %s25 = sadd.s32 1, %s16
    %s26 = scalar_select %p23, %s25, %s16
    %p27 = scmp.ge.s32.totalorder %s26, 2
    %s28 = scalar_select %p27, 0, %s26
    %s29 = ssub.s32 %s16, %s28
    %s30 = ssub.s32 %s17, %s24
    %s31 = sor.u32 %s29, %s30
    %p32 = scmp.eq.s32.totalorder %s31, 0
    %s34 = sadd.s32 %s33, 1
    %s35 = scalar_select %p32, %s33, %s34
    %p38 = pneg %p32
    %p39 = scmp.eq.s32.totalorder %s9, 1
    %p40 = por %p38, %p39
    %p41 = scmp.ne.s32.totalorder %s33, %s36
    %p42 = scmp.eq.s32.totalorder %s9, 0
    %p43 = por %p41, %p42
    %p44 = scmp.ne.s32.totalorder %s33, %s36
    %p45 = scmp.eq.s32.totalorder %s14, 1
    %p46 = por %p44, %p45
    %p47 = scmp.ne.s32.totalorder %s36, %s37
    %p48 = scmp.eq.s32.totalorder %s14, 0
    %p49 = por %p47, %p48
    %p50 = scmp.ne.s32.totalorder %s36, %s37
    %p51 = scmp.eq.s32.totalorder %s15, 1
    %p52 = por %p50, %p51
    %p54 = scmp.ne.s32.totalorder %s37, %s53
    %p55 = scmp.eq.s32.totalorder %s15, 0
    %p56 = por %p54, %p55
    %s58 = sadd.s32 %s57, 1
    %p61 = scmp.eq.s32.totalorder %s9, 1
    %p62 = scmp.ne.s32.totalorder %s57, %s59
    %p63 = scmp.eq.s32.totalorder %s9, 0
    %p64 = por %p62, %p63
    %p65 = scmp.ne.s32.totalorder %s57, %s59
    %p66 = scmp.eq.s32.totalorder %s14, 1
    %p67 = por %p65, %p66
    %p68 = scmp.ne.s32.totalorder %s59, %s60
    %p69 = scmp.eq.s32.totalorder %s14, 0
    %p70 = por %p68, %p69
    %p71 = scmp.ne.s32.totalorder %s59, %s60
    %p72 = scmp.eq.s32.totalorder %s15, 1
    %p73 = por %p71, %p72
    %p75 = scmp.ne.s32.totalorder %s60, %s74
    %p76 = scmp.eq.s32.totalorder %s15, 0
    %p77 = por %p75, %p76
    %s79 = sadd.s32 %s78, 1
    %p82 = scmp.eq.s32.totalorder %s9, 1
    %p83 = scmp.ne.s32.totalorder %s78, %s80
    %p84 = scmp.eq.s32.totalorder %s9, 0
    %p85 = por %p83, %p84
    %p86 = scmp.ne.s32.totalorder %s78, %s80
    %p87 = scmp.eq.s32.totalorder %s14, 1
    %p88 = por %p86, %p87
    %p89 = scmp.ne.s32.totalorder %s80, %s81
    %p90 = scmp.eq.s32.totalorder %s14, 0
    %p91 = por %p89, %p90
    %p92 = scmp.ne.s32.totalorder %s80, %s81
    %p93 = scmp.eq.s32.totalorder %s15, 1
    %p94 = por %p92, %p93
    %p96 = scmp.ne.s32.totalorder %s81, %s95
    %p97 = scmp.eq.s32.totalorder %s15, 0
    %p98 = por %p96, %p97
    %s99 = ssub.s32 %s16, %s28
    %s100 = ssub.s32 %s17, %s24
    %s101 = sor.u32 %s99, %s100
    %p102 = scmp.eq.s32.totalorder %s101, 0
    %s104 = sadd.s32 %s103, 1
    %s105 = scalar_select %p102, %s103, %s104
    %p108 = pneg %p102
    %p109 = scmp.eq.s32.totalorder %s9, 1
    %p110 = por %p108, %p109
    %p111 = scmp.ne.s32.totalorder %s103, %s106
    %p112 = scmp.eq.s32.totalorder %s9, 0
    %p113 = por %p111, %p112
    %p114 = scmp.ne.s32.totalorder %s103, %s106
    %p115 = scmp.eq.s32.totalorder %s14, 1
    %p116 = por %p114, %p115
    %p117 = scmp.ne.s32.totalorder %s106, %s107
    %p118 = scmp.eq.s32.totalorder %s14, 0
    %p119 = por %p117, %p118
    %p120 = scmp.ne.s32.totalorder %s106, %s107
    %p121 = scmp.eq.s32.totalorder %s15, 1
    %p122 = por %p120, %p121
    %p124 = scmp.ne.s32.totalorder %s107, %s123
    %p125 = scmp.eq.s32.totalorder %s15, 0
    %p126 = por %p124, %p125
    %p127 = scmp.le.s32.totalorder 1, %s9
    %p128 = scmp.lt.s32.totalorder %s9, 3
    %p129 = pnand %p127, %p128
    %p130 = pneg %p129
    // Predicated region
    $region9: #{conv_block_forward.2} parent=5 // pred_check
      _
    $region10: #{conv_block_forward.2} parent=5 // pred_check_branch
      %132 = sbr.rel (%p129) target = $region12
    $region11: #{conv_block_forward.2} parent=5 // pred_region
      %s133 = ssub.s32 %s9, 1
      // Predicated region
      $region13: #{conv_block_forward.2} parent=11 // pred_check
        %p134 = pneg %p70
      $region14: #{conv_block_forward.2} parent=11 // pred_check_branch
        %136 = sbr.rel (%p134) target = $region16
      $region15: #{conv_block_forward.2} parent=11 // pred_region
        _
      $region16: #{conv_block_forward.2} parent=11 // pred_fallthru
        _
      // Predicated region
      $region17: #{conv_block_forward.2} parent=11 // pred_check
        %p137 = pneg %p91
      $region18: #{conv_block_forward.2} parent=11 // pred_check_branch
        %139 = sbr.rel (%p137) target = $region20
      $region19: #{conv_block_forward.2} parent=11 // pred_region
        _
      $region20: #{conv_block_forward.2} parent=11 // pred_fallthru
        _
    $region12: #{conv_block_forward.2} parent=5 // pred_fallthru
      _
    %p140 = scmp.lt.s32.totalorder %s9, 2
    // Predicated region
    $region21: #{conv_block_forward.2} parent=5 // pred_check
      %p141 = pneg %p140
    $region22: #{conv_block_forward.2} parent=5 // pred_check_branch
      %143 = sbr.rel (%p141) target = $region24
    $region23: #{conv_block_forward.2} parent=5 // pred_region
      // Predicated region
      $region25: #{conv_block_forward.2} parent=23 // pred_check
        %p144 = pneg %p43
      $region26: #{conv_block_forward.2} parent=23 // pred_check_branch
        %146 = sbr.rel (%p144) target = $region28
      $region27: #{conv_block_forward.2} parent=23 // pred_region
        %s147 = smul.u32 8, %s17
        %p148 = scmp.lt.s32.totalorder %s16, 1
        %s149 = scalar_select %p148, %s16, 1
        %p150 = scmp.lt.s32.totalorder %s147, 7
        %s151 = scalar_select %p150, %s147, 7
        %s152 = smul.addr %s151, 8
        %s153 = smul.addr %s149, 64
        %s154 = sadd.s32 %s152, %s153
        %s155 = smul.addr %s154, 4
        %s156 = scalar_lea.vmem %s0, %s155
        %s157 = smul.u32 8, %s17
      $region28: #{conv_block_forward.2} parent=23 // pred_fallthru
        _
    $region24: #{conv_block_forward.2} parent=5 // pred_fallthru
      _
    %p158 = scmp.le.s32.totalorder 1, %s9
    %p159 = scmp.lt.s32.totalorder %s9, 3
    %p160 = pnand %p158, %p159
    %p161 = pneg %p160
    // Predicated region
    $region29: #{conv_block_forward.2} parent=5 // pred_check
      _
    $region30: #{conv_block_forward.2} parent=5 // pred_check_branch
      %163 = sbr.rel (%p160) target = $region32
    $region31: #{conv_block_forward.2} parent=5 // pred_region
      %s164 = ssub.s32 %s9, 1
      %s165 = smul.u32 8, %s19
      %p166 = scmp.lt.s32.totalorder %s18, 1
      %s167 = scalar_select %p166, %s18, 1
      %p168 = scmp.lt.s32.totalorder %s165, 7
      %s169 = scalar_select %p168, %s165, 7
      %s170 = smul.addr %s169, 8
      %s171 = smul.addr %s167, 64
      %s172 = sadd.s32 %s170, %s171
      %s173 = smul.addr %s172, 4
      %s174 = scalar_lea.vmem %s0, %s173
      %p175 = pneg %p49
      %p176 = pneg %p46
      %p177 = pneg %p70
      %p178 = pneg %p67
      %p179 = pneg %p91
      %p180 = pneg %p88
      %p181 = pneg %p119
      %p182 = pneg %p116
      %s183 = smul.u32 8, %s19
      %p184 = scmp.lt.s32.totalorder %s18, 1
      %s185 = scalar_select %p184, %s18, 1
      %p186 = scmp.lt.s32.totalorder %s183, 7
      %s187 = scalar_select %p186, %s183, 7
      %s188 = smul.addr %s187, 8
      %s189 = smul.addr %s185, 64
      %s190 = sadd.s32 %s188, %s189
      %s191 = smul.addr %s190, 4
      %s192 = scalar_lea.vmem %s3, %s191
      %s193 = smul.u32 8, %s19
      %p194 = scmp.lt.s32.totalorder %s18, 1
      %s195 = scalar_select %p194, %s18, 1
      %p196 = scmp.lt.s32.totalorder %s193, 7
      %s197 = scalar_select %p196, %s193, 7
      %s198 = smul.addr %s197, 8
      %s199 = smul.addr %s195, 64
      %s200 = sadd.s32 %s198, %s199
      %s201 = smul.addr %s200, 4
      %s202 = scalar_lea.vmem %s0, %s201
      %s203 = smul.u32 8, %s19
      %s204 = smul.u32 8, %s19
      %p205 = scmp.lt.s32.totalorder %s18, 1
      %s206 = scalar_select %p205, %s18, 1
      %p207 = scmp.lt.s32.totalorder %s204, 7
      %s208 = scalar_select %p207, %s204, 7
      %s209 = smul.addr %s208, 8
      %s210 = smul.addr %s206, 64
      %s211 = sadd.s32 %s209, %s210
      %s212 = smul.addr %s211, 4
      %s213 = scalar_lea.vmem %s3, %s212
      %s214 = smul.u32 8, %s19
      %v216 = vld [vmem:[%s202] sm:$0xf]
      %v217 = vld [vmem:[%s202 + $0x4] sm:$0xf]
      %v218 = vld [vmem:[%s202 + $0x8] sm:$0xf]
      %v219 = vld [vmem:[%s202 + $0xc] sm:$0xf]
      %v220 = vld [vmem:[%s202 + $0x10] sm:$0xf]
      %v221 = vld [vmem:[%s202 + $0x14] sm:$0xf]
      %v222 = vld [vmem:[%s202 + $0x18] sm:$0xf]
      %v223 = vld [vmem:[%s202 + $0x1c] sm:$0xf]
      %v224 = vld [vmem:[%s202 + $0x20] sm:$0xf]
      %v225 = vld [vmem:[%s202 + $0x24] sm:$0xf]
      %v226 = vld [vmem:[%s202 + $0x28] sm:$0xf]
      %v227 = vld [vmem:[%s202 + $0x2c] sm:$0xf]
      %v228 = vld [vmem:[%s202 + $0x30] sm:$0xf]
      %v229 = vld [vmem:[%s202 + $0x34] sm:$0xf]
      %v230 = vld [vmem:[%s202 + $0x38] sm:$0xf]
      %v231 = vld [vmem:[%s202 + $0x3c] sm:$0xf]
      %v232 = vld [vmem:[%s202 + $0x40] sm:$0xf]
      %v233 = vld [vmem:[%s202 + $0x44] sm:$0xf]
      %v234 = vld [vmem:[%s202 + $0x48] sm:$0xf]
      %v235 = vld [vmem:[%s202 + $0x4c] sm:$0xf]
      %v236 = vld [vmem:[%s202 + $0x50] sm:$0xf]
      %v237 = vld [vmem:[%s202 + $0x54] sm:$0xf]
      %v238 = vld [vmem:[%s202 + $0x58] sm:$0xf]
      %v239 = vld [vmem:[%s202 + $0x5c] sm:$0xf]
      %v240 = vld [vmem:[%s202 + $0x60] sm:$0xf]
      %v241 = vld [vmem:[%s202 + $0x64] sm:$0xf]
      %v242 = vld [vmem:[%s202 + $0x68] sm:$0xf]
      %v243 = vld [vmem:[%s202 + $0x6c] sm:$0xf]
      %v244 = vld [vmem:[%s202 + $0x70] sm:$0xf]
      %v245 = vld [vmem:[%s202 + $0x74] sm:$0xf]
      %v246 = vld [vmem:[%s202 + $0x78] sm:$0xf]
      %v247 = vld [vmem:[%s202 + $0x7c] sm:$0xf]
      %v248 = vld [vmem:[%s202 + $0x80] sm:$0xf]
      %v249 = vld [vmem:[%s202 + $0x84] sm:$0xf]
      %v250 = vld [vmem:[%s202 + $0x88] sm:$0xf]
      %v251 = vld [vmem:[%s202 + $0x8c] sm:$0xf]
      %v252 = vld [vmem:[%s202 + $0x90] sm:$0xf]
      %v253 = vld [vmem:[%s202 + $0x94] sm:$0xf]
      %v254 = vld [vmem:[%s202 + $0x98] sm:$0xf]
      %v255 = vld [vmem:[%s202 + $0x9c] sm:$0xf]
      %v256 = vld [vmem:[%s202 + $0xa0] sm:$0xf]
      %v257 = vld [vmem:[%s202 + $0xa4] sm:$0xf]
      %v258 = vld [vmem:[%s202 + $0xa8] sm:$0xf]
      %v259 = vld [vmem:[%s202 + $0xac] sm:$0xf]
      %v260 = vld [vmem:[%s202 + $0xb0] sm:$0xf]
      %v261 = vld [vmem:[%s202 + $0xb4] sm:$0xf]
      %v262 = vld [vmem:[%s202 + $0xb8] sm:$0xf]
      %v263 = vld [vmem:[%s202 + $0xbc] sm:$0xf]
      %v264 = vld [vmem:[%s202 + $0xc0] sm:$0xf]
      %v265 = vld [vmem:[%s202 + $0xc4] sm:$0xf]
      %v266 = vld [vmem:[%s202 + $0xc8] sm:$0xf]
      %v267 = vld [vmem:[%s202 + $0xcc] sm:$0xf]
      %v268 = vld [vmem:[%s202 + $0xd0] sm:$0xf]
      %v269 = vld [vmem:[%s202 + $0xd4] sm:$0xf]
      %v270 = vld [vmem:[%s202 + $0xd8] sm:$0xf]
      %v271 = vld [vmem:[%s202 + $0xdc] sm:$0xf]
      %v272 = vld [vmem:[%s202 + $0xe0] sm:$0xf]
      %v273 = vld [vmem:[%s202 + $0xe4] sm:$0xf]
      %v274 = vld [vmem:[%s202 + $0xe8] sm:$0xf]
      %v275 = vld [vmem:[%s202 + $0xec] sm:$0xf]
      %v276 = vld [vmem:[%s202 + $0xf0] sm:$0xf]
      %v277 = vld [vmem:[%s202 + $0xf4] sm:$0xf]
      %v278 = vld [vmem:[%s202 + $0xf8] sm:$0xf]
      %v279 = vld [vmem:[%s202 + $0xfc] sm:$0xf]
      %v280 = vld [vmem:[%s1] sm:$0xf]
      %v281 = vld [vmem:[%s1 + $0x4] sm:$0xf]
      %v282 = vld [vmem:[%s1 + $0x8] sm:$0xf]
      %v283 = vld [vmem:[%s1 + $0xc] sm:$0xf]
      %v284 = vld [vmem:[%s1 + $0x10] sm:$0xf]
      %v285 = vld [vmem:[%s1 + $0x14] sm:$0xf]
      %v286 = vld [vmem:[%s1 + $0x18] sm:$0xf]
      %v287 = vld [vmem:[%s1 + $0x1c] sm:$0xf]
      %v288 = vld [vmem:[%s1 + $0x20] sm:$0xf]
      %v289 = vld [vmem:[%s1 + $0x24] sm:$0xf]
      %v290 = vld [vmem:[%s1 + $0x28] sm:$0xf]
      %v291 = vld [vmem:[%s1 + $0x2c] sm:$0xf]
      %v292 = vld [vmem:[%s1 + $0x30] sm:$0xf]
      %v293 = vld [vmem:[%s1 + $0x34] sm:$0xf]
      %v358 = vunpack.c.l.b16 %v216
      %v359 = vunpack.c.l.b16 %v217
      %v360 = vunpack.c.l.b16 %v218
      %v361 = vunpack.c.l.b16 %v219
      %v362 = vunpack.c.l.b16 %v220
      %v363 = vunpack.c.l.b16 %v221
      %v364 = vunpack.c.l.b16 %v222
      %v365 = vunpack.c.l.b16 %v223
      %v366 = vunpack.c.l.b16 %v224
      %v367 = vunpack.c.l.b16 %v225
      %v368 = vunpack.c.l.b16 %v226
      %v369 = vunpack.c.l.b16 %v227
      %v370 = vunpack.c.l.b16 %v228
      %v371 = vunpack.c.l.b16 %v229
      %v372 = vunpack.c.l.b16 %v230
      %v373 = vunpack.c.l.b16 %v231
      %v374 = vunpack.c.l.b16 %v232
      %v375 = vunpack.c.l.b16 %v233
      %v376 = vunpack.c.l.b16 %v234
      %v377 = vunpack.c.l.b16 %v235
      %v378 = vunpack.c.l.b16 %v236
      %v379 = vunpack.c.l.b16 %v237
      %v380 = vunpack.c.l.b16 %v238
      %v381 = vunpack.c.l.b16 %v239
      %v382 = vunpack.c.l.b16 %v240
      %v383 = vunpack.c.l.b16 %v241
      %v384 = vunpack.c.l.b16 %v242
      %v385 = vunpack.c.l.b16 %v243
      %v386 = vunpack.c.l.b16 %v244
      %v387 = vunpack.c.l.b16 %v245
      %v388 = vunpack.c.l.b16 %v246
      %v389 = vunpack.c.l.b16 %v247
      %v390 = vunpack.c.l.b16 %v248
      %v391 = vunpack.c.l.b16 %v249
      %v392 = vunpack.c.l.b16 %v250
      %v393 = vunpack.c.l.b16 %v251
      %v394 = vunpack.c.l.b16 %v252
      %v395 = vunpack.c.l.b16 %v253
      %v396 = vunpack.c.l.b16 %v254
      %v397 = vunpack.c.l.b16 %v255
      %v398 = vunpack.c.l.b16 %v256
      %v399 = vunpack.c.l.b16 %v257
      %v400 = vunpack.c.l.b16 %v258
      %v401 = vunpack.c.l.b16 %v259
      %v402 = vunpack.c.l.b16 %v260
      %v403 = vunpack.c.l.b16 %v261
      %v404 = vunpack.c.l.b16 %v262
      %v405 = vunpack.c.l.b16 %v263
      %v406 = vunpack.c.l.b16 %v264
      %v407 = vunpack.c.l.b16 %v265
      %v408 = vunpack.c.l.b16 %v266
      %v409 = vunpack.c.l.b16 %v267
      %v410 = vunpack.c.l.b16 %v268
      %v411 = vunpack.c.l.b16 %v269
      %v412 = vunpack.c.l.b16 %v270
      %v413 = vunpack.c.l.b16 %v271
      %v414 = vunpack.c.l.b16 %v272
      %v415 = vunpack.c.l.b16 %v273
      %v416 = vunpack.c.l.b16 %v274
      %v417 = vunpack.c.l.b16 %v275
      %v418 = vunpack.c.l.b16 %v276
      %v419 = vunpack.c.l.b16 %v277
      %v420 = vunpack.c.l.b16 %v278
      %v421 = vunpack.c.l.b16 %v279
      %v422 = vpack.c.b16 %v359, %v358
      %v423 = vpack.c.b16 %v361, %v360
      %v424 = vpack.c.b16 %v363, %v362
      %v425 = vpack.c.b16 %v365, %v364
      %v426 = vpack.c.b16 %v367, %v366
      %v427 = vpack.c.b16 %v369, %v368
      %v428 = vpack.c.b16 %v371, %v370
      %v429 = vpack.c.b16 %v373, %v372
      %v430 = vpack.c.b16 %v375, %v374
      %v431 = vpack.c.b16 %v377, %v376
      %v432 = vpack.c.b16 %v379, %v378
      %v433 = vpack.c.b16 %v381, %v380
      %v434 = vpack.c.b16 %v383, %v382
      %v435 = vpack.c.b16 %v385, %v384
      %v436 = vpack.c.b16 %v387, %v386
      %v437 = vpack.c.b16 %v389, %v388
      %v438 = vpack.c.b16 %v391, %v390
      %v439 = vpack.c.b16 %v393, %v392
      %v440 = vpack.c.b16 %v395, %v394
      %v441 = vpack.c.b16 %v397, %v396
      %v442 = vpack.c.b16 %v399, %v398
      %v443 = vpack.c.b16 %v401, %v400
      %v444 = vpack.c.b16 %v403, %v402
      %v445 = vpack.c.b16 %v405, %v404
      %v446 = vpack.c.b16 %v407, %v406
      %v447 = vpack.c.b16 %v409, %v408
      %v448 = vpack.c.b16 %v411, %v410
      %v449 = vpack.c.b16 %v413, %v412
      %v450 = vpack.c.b16 %v415, %v414
      %v451 = vpack.c.b16 %v417, %v416
      %v452 = vpack.c.b16 %v419, %v418
      %v453 = vpack.c.b16 %v421, %v420
      %v468 = vunpack.c.l.b16 %v280
      %v469 = vunpack.c.l.b16 %v281
      %v470 = vunpack.c.l.b16 %v282
      %v471 = vunpack.c.l.b16 %v283
      %v472 = vunpack.c.l.b16 %v284
      %v473 = vunpack.c.l.b16 %v285
      %v474 = vunpack.c.l.b16 %v286
      %v475 = vunpack.c.l.b16 %v287
      %v476 = vunpack.c.l.b16 %v288
      %v477 = vunpack.c.l.b16 %v289
      %v478 = vunpack.c.l.b16 %v290
      %v479 = vunpack.c.l.b16 %v291
      %v480 = vunpack.c.l.b16 %v292
      %v481 = vunpack.c.l.b16 %v293
      %v482 = vpack.c.b16 %v469, %v468
      %v483 = vpack.c.b16 %v471, %v470
      %v484 = vpack.c.b16 %v473, %v472
      %v485 = vpack.c.b16 %v475, %v474
      %v486 = vpack.c.b16 %v477, %v476
      %v487 = vpack.c.b16 %v479, %v478
      %v488 = vpack.c.b16 %v481, %v480
      %vm496 = vcmask 916480
      %v498 = vsel %vm496, %v422, 0
      %v501 = vsel %vm496, %v423, 0
      %v504 = vsel %vm496, %v424, 0
      %v507 = vsel %vm496, %v425, 0
      %v510 = vsel %vm496, %v426, 0
      %v513 = vsel %vm496, %v427, 0
      %v516 = vsel %vm496, %v428, 0
      %v519 = vsel %vm496, %v429, 0
      %v522 = vsel %vm496, %v430, 0
      %v525 = vsel %vm496, %v431, 0
      %v528 = vsel %vm496, %v432, 0
      %v531 = vsel %vm496, %v433, 0
      %v534 = vsel %vm496, %v434, 0
      %v537 = vsel %vm496, %v435, 0
      %v540 = vsel %vm496, %v436, 0
      %v543 = vsel %vm496, %v437, 0
      %v546 = vsel %vm496, %v438, 0
      %v549 = vsel %vm496, %v439, 0
      %v552 = vsel %vm496, %v440, 0
      %v555 = vsel %vm496, %v441, 0
      %v558 = vsel %vm496, %v442, 0
      %v561 = vsel %vm496, %v443, 0
      %v564 = vsel %vm496, %v444, 0
      %v567 = vsel %vm496, %v445, 0
      %v570 = vsel %vm496, %v446, 0
      %v573 = vsel %vm496, %v447, 0
      %v576 = vsel %vm496, %v448, 0
      %v579 = vsel %vm496, %v449, 0
      %v582 = vsel %vm496, %v450, 0
      %v585 = vsel %vm496, %v451, 0
      %v588 = vsel %vm496, %v452, 0
      %v591 = vsel %vm496, %v453, 0
      %593 = vmatprep.subr.bf16.mxu0 0
      %594 = vmatpush1.bf16.msra.mxu0 0
      %595 = vmatprep.subr.bf16.mxu0 0
      %596 = vmatpush1.bf16.msra.mxu0 %v488
      %597 = vmatprep.subr.bf16.mxu0 0
      %598 = vmatpush1.bf16.msra.mxu0 %v487
      %599 = vmatprep.subr.bf16.mxu0 0
      %600 = vmatpush1.bf16.msra.mxu0 %v486
      %601 = vmatprep.subr.bf16.mxu0 0
      %602 = vmatpush1.bf16.msra.mxu0 %v485
      %603 = vmatprep.subr.bf16.mxu0 0
      %604 = vmatpush1.bf16.msra.mxu0 %v484
      %605 = vmatprep.subr.bf16.mxu0 0
      %606 = vmatpush1.bf16.msra.mxu0 %v483
      %607 = vmatprep.subr.bf16.mxu0 0
      %608 = vmatpush1.bf16.msra.mxu0 %v482
      %609 = vmatprep.subr.bf16.mxu0 0
      %610 = vmatpush2.bf16.msra.mxu0 0
      %611 = vmatprep.subr.bf16.mxu0 0
      %612 = vmatpush2.bf16.msra.mxu0 0
      %613 = vmatprep.subr.bf16.mxu0 0
      %614 = vmatpush2.bf16.msra.mxu0 0
      %615 = vmatprep.subr.bf16.mxu0 0
      %616 = vmatpush2.bf16.msra.mxu0 0
      %617 = vmatprep.subr.bf16.mxu0 0
      %618 = vmatpush2.bf16.msra.mxu0 0
      %619 = vmatprep.subr.bf16.mxu0 0
      %620 = vmatpush2.bf16.msra.mxu0 0
      %621 = vmatprep.subr.bf16.mxu0 0
      %622 = vmatpush2.bf16.msra.mxu0 0
      %623 = vmatprep.subr.bf16.mxu0 0
      %624 = vmatpush2.bf16.msra.mxu0 0
      %625 = vmatprep.mubr.bf16.mxu0 0
      %626 = vmatmul.mubr.bf16.gmra.mxu0 %v498
      %v627 = vpop.f32.mrf.mxu0
      %v628 = vadd.f32 0.0, %v627
      %v629 = vpop.f32.mrf.mxu0
      %v630 = vpop.f32.mrf.mxu0
      %v631 = vadd.f32 0.0, %v630
      %v632 = vpop.f32.mrf.mxu0
      %633 = vmatprep.mubr.bf16.mxu0 0
      %634 = vmatmul.mubr.bf16.gmra.mxu0 %v501
      %v635 = vpop.f32.mrf.mxu0
      %v636 = vadd.f32 0.0, %v635
      %v637 = vpop.f32.mrf.mxu0
      %v638 = vpop.f32.mrf.mxu0
      %v639 = vadd.f32 0.0, %v638
      %v640 = vpop.f32.mrf.mxu0
      %641 = vmatprep.mubr.bf16.mxu0 0
      %642 = vmatmul.mubr.bf16.gmra.mxu0 %v504
      %v643 = vpop.f32.mrf.mxu0
      %v644 = vadd.f32 0.0, %v643
      %v645 = vpop.f32.mrf.mxu0
      %v646 = vpop.f32.mrf.mxu0
      %v647 = vadd.f32 0.0, %v646
      %v648 = vpop.f32.mrf.mxu0
      %649 = vmatprep.mubr.bf16.mxu0 0
      %650 = vmatmul.mubr.bf16.gmra.mxu0 %v507
      %v651 = vpop.f32.mrf.mxu0
      %v652 = vadd.f32 0.0, %v651
      %v653 = vpop.f32.mrf.mxu0
      %v654 = vpop.f32.mrf.mxu0
      %v655 = vadd.f32 0.0, %v654
      %v656 = vpop.f32.mrf.mxu0
      %657 = vmatprep.mubr.bf16.mxu0 0
      %658 = vmatmul.mubr.bf16.gmra.mxu0 %v510
      %v659 = vpop.f32.mrf.mxu0
      %v660 = vadd.f32 0.0, %v659
      %v661 = vpop.f32.mrf.mxu0
      %v662 = vpop.f32.mrf.mxu0
      %v663 = vadd.f32 0.0, %v662
      %v664 = vpop.f32.mrf.mxu0
      %665 = vmatprep.mubr.bf16.mxu0 0
      %666 = vmatmul.mubr.bf16.gmra.mxu0 %v513
      %v667 = vpop.f32.mrf.mxu0
      %v668 = vadd.f32 0.0, %v667
      %v669 = vpop.f32.mrf.mxu0
      %v670 = vpop.f32.mrf.mxu0
      %v671 = vadd.f32 0.0, %v670
      %v672 = vpop.f32.mrf.mxu0
      %673 = vmatprep.mubr.bf16.mxu0 0
      %674 = vmatmul.mubr.bf16.gmra.mxu0 %v516
      %v675 = vpop.f32.mrf.mxu0
      %v676 = vadd.f32 0.0, %v675
      %v677 = vpop.f32.mrf.mxu0
      %v678 = vpop.f32.mrf.mxu0
      %v679 = vadd.f32 0.0, %v678
      %v680 = vpop.f32.mrf.mxu0
      %681 = vmatprep.mubr.bf16.mxu0 0
      %682 = vmatmul.mubr.bf16.gmra.mxu0 %v519
      %v683 = vpop.f32.mrf.mxu0
      %v684 = vadd.f32 0.0, %v683
      %v685 = vpop.f32.mrf.mxu0
      %v686 = vpop.f32.mrf.mxu0
      %v687 = vadd.f32 0.0, %v686
      %v688 = vpop.f32.mrf.mxu0
      %689 = vmatprep.mubr.bf16.mxu0 0
      %690 = vmatmul.mubr.bf16.gmra.mxu0 %v522
      %v691 = vpop.f32.mrf.mxu0
      %v692 = vadd.f32 0.0, %v691
      %v693 = vpop.f32.mrf.mxu0
      %v694 = vpop.f32.mrf.mxu0
      %v695 = vadd.f32 0.0, %v694
      %v696 = vpop.f32.mrf.mxu0
      %697 = vmatprep.mubr.bf16.mxu0 0
      %698 = vmatmul.mubr.bf16.gmra.mxu0 %v525
      %v699 = vpop.f32.mrf.mxu0
      %v700 = vadd.f32 0.0, %v699
      %v701 = vpop.f32.mrf.mxu0
      %v702 = vpop.f32.mrf.mxu0
      %v703 = vadd.f32 0.0, %v702
      %v704 = vpop.f32.mrf.mxu0
      %705 = vmatprep.mubr.bf16.mxu0 0
      %706 = vmatmul.mubr.bf16.gmra.mxu0 %v528
      %v707 = vpop.f32.mrf.mxu0
      %v708 = vadd.f32 0.0, %v707
      %v709 = vpop.f32.mrf.mxu0
      %v710 = vpop.f32.mrf.mxu0
      %v711 = vadd.f32 0.0, %v710
      %v712 = vpop.f32.mrf.mxu0
      %713 = vmatprep.mubr.bf16.mxu0 0
      %714 = vmatmul.mubr.bf16.gmra.mxu0 %v531
      %v715 = vpop.f32.mrf.mxu0
      %v716 = vadd.f32 0.0, %v715
      %v717 = vpop.f32.mrf.mxu0
      %v718 = vpop.f32.mrf.mxu0
      %v719 = vadd.f32 0.0, %v718
      %v720 = vpop.f32.mrf.mxu0
      %721 = vmatprep.mubr.bf16.mxu0 0
      %722 = vmatmul.mubr.bf16.gmra.mxu0 %v534
      %v723 = vpop.f32.mrf.mxu0
      %v724 = vadd.f32 0.0, %v723
      %v725 = vpop.f32.mrf.mxu0
      %v726 = vpop.f32.mrf.mxu0
      %v727 = vadd.f32 0.0, %v726
      %v728 = vpop.f32.mrf.mxu0
      %729 = vmatprep.mubr.bf16.mxu0 0
      %730 = vmatmul.mubr.bf16.gmra.mxu0 %v537
      %v731 = vpop.f32.mrf.mxu0
      %v732 = vadd.f32 0.0, %v731
      %v733 = vpop.f32.mrf.mxu0
      %v734 = vpop.f32.mrf.mxu0
      %v735 = vadd.f32 0.0, %v734
      %v736 = vpop.f32.mrf.mxu0
      %737 = vmatprep.mubr.bf16.mxu0 0
      %738 = vmatmul.mubr.bf16.gmra.mxu0 %v540
      %v739 = vpop.f32.mrf.mxu0
      %v740 = vadd.f32 0.0, %v739
      %v741 = vpop.f32.mrf.mxu0
      %v742 = vpop.f32.mrf.mxu0
      %v743 = vadd.f32 0.0, %v742
      %v744 = vpop.f32.mrf.mxu0
      %745 = vmatprep.mubr.bf16.mxu0 0
      %746 = vmatmul.mubr.bf16.gmra.mxu0 %v543
      %v747 = vpop.f32.mrf.mxu0
      %v748 = vadd.f32 0.0, %v747
      %v749 = vpop.f32.mrf.mxu0
      %v750 = vpop.f32.mrf.mxu0
      %v751 = vadd.f32 0.0, %v750
      %v752 = vpop.f32.mrf.mxu0
      %753 = vmatprep.mubr.bf16.mxu0 0
      %754 = vmatmul.mubr.bf16.gmra.mxu0 %v546
      %v755 = vpop.f32.mrf.mxu0
      %v756 = vadd.f32 0.0, %v755
      %v757 = vpop.f32.mrf.mxu0
      %v758 = vpop.f32.mrf.mxu0
      %v759 = vadd.f32 0.0, %v758
      %v760 = vpop.f32.mrf.mxu0
      %761 = vmatprep.mubr.bf16.mxu0 0
      %762 = vmatmul.mubr.bf16.gmra.mxu0 %v549
      %v763 = vpop.f32.mrf.mxu0
      %v764 = vadd.f32 0.0, %v763
      %v765 = vpop.f32.mrf.mxu0
      %v766 = vpop.f32.mrf.mxu0
      %v767 = vadd.f32 0.0, %v766
      %v768 = vpop.f32.mrf.mxu0
      %769 = vmatprep.mubr.bf16.mxu0 0
      %770 = vmatmul.mubr.bf16.gmra.mxu0 %v552
      %v771 = vpop.f32.mrf.mxu0
      %v772 = vadd.f32 0.0, %v771
      %v773 = vpop.f32.mrf.mxu0
      %v774 = vpop.f32.mrf.mxu0
      %v775 = vadd.f32 0.0, %v774
      %v776 = vpop.f32.mrf.mxu0
      %777 = vmatprep.mubr.bf16.mxu0 0
      %778 = vmatmul.mubr.bf16.gmra.mxu0 %v555
      %v779 = vpop.f32.mrf.mxu0
      %v780 = vadd.f32 0.0, %v779
      %v781 = vpop.f32.mrf.mxu0
      %v782 = vpop.f32.mrf.mxu0
      %v783 = vadd.f32 0.0, %v782
      %v784 = vpop.f32.mrf.mxu0
      %785 = vmatprep.mubr.bf16.mxu0 0
      %786 = vmatmul.mubr.bf16.gmra.mxu0 %v558
      %v787 = vpop.f32.mrf.mxu0
      %v788 = vadd.f32 0.0, %v787
      %v789 = vpop.f32.mrf.mxu0
      %v790 = vpop.f32.mrf.mxu0
      %v791 = vadd.f32 0.0, %v790
      %v792 = vpop.f32.mrf.mxu0
      %793 = vmatprep.mubr.bf16.mxu0 0
      %794 = vmatmul.mubr.bf16.gmra.mxu0 %v561
      %v795 = vpop.f32.mrf.mxu0
      %v796 = vadd.f32 0.0, %v795
      %v797 = vpop.f32.mrf.mxu0
      %v798 = vpop.f32.mrf.mxu0
      %v799 = vadd.f32 0.0, %v798
      %v800 = vpop.f32.mrf.mxu0
      %801 = vmatprep.mubr.bf16.mxu0 0
      %802 = vmatmul.mubr.bf16.gmra.mxu0 %v564
      %v803 = vpop.f32.mrf.mxu0
      %v804 = vadd.f32 0.0, %v803
      %v805 = vpop.f32.mrf.mxu0
      %v806 = vpop.f32.mrf.mxu0
      %v807 = vadd.f32 0.0, %v806
      %v808 = vpop.f32.mrf.mxu0
      %809 = vmatprep.mubr.bf16.mxu0 0
      %810 = vmatmul.mubr.bf16.gmra.mxu0 %v567
      %v811 = vpop.f32.mrf.mxu0
      %v812 = vadd.f32 0.0, %v811
      %v813 = vpop.f32.mrf.mxu0
      %v814 = vpop.f32.mrf.mxu0
      %v815 = vadd.f32 0.0, %v814
      %v816 = vpop.f32.mrf.mxu0
      %817 = vmatprep.mubr.bf16.mxu0 0
      %818 = vmatmul.mubr.bf16.gmra.mxu0 %v570
      %v819 = vpop.f32.mrf.mxu0
      %v820 = vadd.f32 0.0, %v819
      %v821 = vpop.f32.mrf.mxu0
      %v822 = vpop.f32.mrf.mxu0
      %v823 = vadd.f32 0.0, %v822
      %v824 = vpop.f32.mrf.mxu0
      %825 = vmatprep.mubr.bf16.mxu0 0
      %826 = vmatmul.mubr.bf16.gmra.mxu0 %v573
      %v827 = vpop.f32.mrf.mxu0
      %v828 = vadd.f32 0.0, %v827
      %v829 = vpop.f32.mrf.mxu0
      %v830 = vpop.f32.mrf.mxu0
      %v831 = vadd.f32 0.0, %v830
      %v832 = vpop.f32.mrf.mxu0
      %833 = vmatprep.mubr.bf16.mxu0 0
      %834 = vmatmul.mubr.bf16.gmra.mxu0 %v576
      %v835 = vpop.f32.mrf.mxu0
      %v836 = vadd.f32 0.0, %v835
      %v837 = vpop.f32.mrf.mxu0
      %v838 = vpop.f32.mrf.mxu0
      %v839 = vadd.f32 0.0, %v838
      %v840 = vpop.f32.mrf.mxu0
      %841 = vmatprep.mubr.bf16.mxu0 0
      %842 = vmatmul.mubr.bf16.gmra.mxu0 %v579
      %v843 = vpop.f32.mrf.mxu0
      %v844 = vadd.f32 0.0, %v843
      %v845 = vpop.f32.mrf.mxu0
      %v846 = vpop.f32.mrf.mxu0
      %v847 = vadd.f32 0.0, %v846
      %v848 = vpop.f32.mrf.mxu0
      %849 = vmatprep.mubr.bf16.mxu0 0
      %850 = vmatmul.mubr.bf16.gmra.mxu0 %v582
      %v851 = vpop.f32.mrf.mxu0
      %v852 = vadd.f32 0.0, %v851
      %v853 = vpop.f32.mrf.mxu0
      %v854 = vpop.f32.mrf.mxu0
      %v855 = vadd.f32 0.0, %v854
      %v856 = vpop.f32.mrf.mxu0
      %857 = vmatprep.mubr.bf16.mxu0 0
      %858 = vmatmul.mubr.bf16.gmra.mxu0 %v585
      %v859 = vpop.f32.mrf.mxu0
      %v860 = vadd.f32 0.0, %v859
      %v861 = vpop.f32.mrf.mxu0
      %v862 = vpop.f32.mrf.mxu0
      %v863 = vadd.f32 0.0, %v862
      %v864 = vpop.f32.mrf.mxu0
      %865 = vmatprep.mubr.bf16.mxu0 0
      %866 = vmatmul.mubr.bf16.gmra.mxu0 %v588
      %v867 = vpop.f32.mrf.mxu0
      %v868 = vadd.f32 0.0, %v867
      %v869 = vpop.f32.mrf.mxu0
      %v870 = vpop.f32.mrf.mxu0
      %v871 = vadd.f32 0.0, %v870
      %v872 = vpop.f32.mrf.mxu0
      %873 = vmatprep.mubr.bf16.mxu0 0
      %874 = vmatmul.mubr.bf16.gmra.mxu0 %v591
      %v875 = vpop.f32.mrf.mxu0
      %v876 = vadd.f32 0.0, %v875
      %v877 = vpop.f32.mrf.mxu0
      %v878 = vpop.f32.mrf.mxu0
      %v879 = vadd.f32 0.0, %v878
      %v880 = vpop.f32.mrf.mxu0
      %881 = vdwg.mxu0
      %v882 = vld [vmem:[%s2] sm:$0x1]
      %v883 = vlaneseq
      %v884 = vshrl.u32 %v883, 7
      %v885 = vsub.s32 0, %v884
      %v886 = vrot.slane %v882, %v885
      %v887 = vmul.f32 %v628, %v886
      %v888 = vmul.f32 %v631, %v886
      %v889 = vmul.f32 %v636, %v886
      %v890 = vmul.f32 %v639, %v886
      %v891 = vmul.f32 %v644, %v886
      %v892 = vmul.f32 %v647, %v886
      %v893 = vmul.f32 %v652, %v886
      %v894 = vmul.f32 %v655, %v886
      %v895 = vmul.f32 %v660, %v886
      %v896 = vmul.f32 %v663, %v886
      %v897 = vmul.f32 %v668, %v886
      %v898 = vmul.f32 %v671, %v886
      %v899 = vmul.f32 %v676, %v886
      %v900 = vmul.f32 %v679, %v886
      %v901 = vmul.f32 %v684, %v886
      %v902 = vmul.f32 %v687, %v886
      %v903 = vmul.f32 %v692, %v886
      %v904 = vmul.f32 %v695, %v886
      %v905 = vmul.f32 %v700, %v886
      %v906 = vmul.f32 %v703, %v886
      %v907 = vmul.f32 %v708, %v886
      %v908 = vmul.f32 %v711, %v886
      %v909 = vmul.f32 %v716, %v886
      %v910 = vmul.f32 %v719, %v886
      %v911 = vmul.f32 %v724, %v886
      %v912 = vmul.f32 %v727, %v886
      %v913 = vmul.f32 %v732, %v886
      %v914 = vmul.f32 %v735, %v886
      %v915 = vmul.f32 %v740, %v886
      %v916 = vmul.f32 %v743, %v886
      %v917 = vmul.f32 %v748, %v886
      %v918 = vmul.f32 %v751, %v886
      %v919 = vmul.f32 %v756, %v886
      %v920 = vmul.f32 %v759, %v886
      %v921 = vmul.f32 %v764, %v886
      %v922 = vmul.f32 %v767, %v886
      %v923 = vmul.f32 %v772, %v886
      %v924 = vmul.f32 %v775, %v886
      %v925 = vmul.f32 %v780, %v886
      %v926 = vmul.f32 %v783, %v886
      %v927 = vmul.f32 %v788, %v886
      %v928 = vmul.f32 %v791, %v886
      %v929 = vmul.f32 %v796, %v886
      %v930 = vmul.f32 %v799, %v886
      %v931 = vmul.f32 %v804, %v886
      %v932 = vmul.f32 %v807, %v886
      %v933 = vmul.f32 %v812, %v886
      %v934 = vmul.f32 %v815, %v886
      %v935 = vmul.f32 %v820, %v886
      %v936 = vmul.f32 %v823, %v886
      %v937 = vmul.f32 %v828, %v886
      %v938 = vmul.f32 %v831, %v886
      %v939 = vmul.f32 %v836, %v886
      %v940 = vmul.f32 %v839, %v886
      %v941 = vmul.f32 %v844, %v886
      %v942 = vmul.f32 %v847, %v886
      %v943 = vmul.f32 %v852, %v886
      %v944 = vmul.f32 %v855, %v886
      %v945 = vmul.f32 %v860, %v886
      %v946 = vmul.f32 %v863, %v886
      %v947 = vmul.f32 %v868, %v886
      %v948 = vmul.f32 %v871, %v886
      %v949 = vmul.f32 %v876, %v886
      %v950 = vmul.f32 %v879, %v886
      %v951 = vld [vmem:[%s2 + $0x1] sm:$0x1]
      %v952 = vlaneseq
      %v953 = vshrl.u32 %v952, 7
      %v954 = vsub.s32 0, %v953
      %v955 = vrot.slane %v951, %v954
      %v956 = vadd.f32 %v887, %v955
      %v957 = vadd.f32 %v888, %v955
      %v958 = vadd.f32 %v889, %v955
      %v959 = vadd.f32 %v890, %v955
      %v960 = vadd.f32 %v891, %v955
      %v961 = vadd.f32 %v892, %v955
      %v962 = vadd.f32 %v893, %v955
      %v963 = vadd.f32 %v894, %v955
      %v964 = vadd.f32 %v895, %v955
      %v965 = vadd.f32 %v896, %v955
      %v966 = vadd.f32 %v897, %v955
      %v967 = vadd.f32 %v898, %v955
      %v968 = vadd.f32 %v899, %v955
      %v969 = vadd.f32 %v900, %v955
      %v970 = vadd.f32 %v901, %v955
      %v971 = vadd.f32 %v902, %v955
      %v972 = vadd.f32 %v903, %v955
      %v973 = vadd.f32 %v904, %v955
      %v974 = vadd.f32 %v905, %v955
      %v975 = vadd.f32 %v906, %v955
      %v976 = vadd.f32 %v907, %v955
      %v977 = vadd.f32 %v908, %v955
      %v978 = vadd.f32 %v909, %v955
      %v979 = vadd.f32 %v910, %v955
      %v980 = vadd.f32 %v911, %v955
      %v981 = vadd.f32 %v912, %v955
      %v982 = vadd.f32 %v913, %v955
      %v983 = vadd.f32 %v914, %v955
      %v984 = vadd.f32 %v915, %v955
      %v985 = vadd.f32 %v916, %v955
      %v986 = vadd.f32 %v917, %v955
      %v987 = vadd.f32 %v918, %v955
      %v988 = vadd.f32 %v919, %v955
      %v989 = vadd.f32 %v920, %v955
      %v990 = vadd.f32 %v921, %v955
      %v991 = vadd.f32 %v922, %v955
      %v992 = vadd.f32 %v923, %v955
      %v993 = vadd.f32 %v924, %v955
      %v994 = vadd.f32 %v925, %v955
      %v995 = vadd.f32 %v926, %v955
      %v996 = vadd.f32 %v927, %v955
      %v997 = vadd.f32 %v928, %v955
      %v998 = vadd.f32 %v929, %v955
      %v999 = vadd.f32 %v930, %v955
      %v1000 = vadd.f32 %v931, %v955
      %v1001 = vadd.f32 %v932, %v955
      %v1002 = vadd.f32 %v933, %v955
      %v1003 = vadd.f32 %v934, %v955
      %v1004 = vadd.f32 %v935, %v955
      %v1005 = vadd.f32 %v936, %v955
      %v1006 = vadd.f32 %v937, %v955
      %v1007 = vadd.f32 %v938, %v955
      %v1008 = vadd.f32 %v939, %v955
      %v1009 = vadd.f32 %v940, %v955
      %v1010 = vadd.f32 %v941, %v955
      %v1011 = vadd.f32 %v942, %v955
      %v1012 = vadd.f32 %v943, %v955
      %v1013 = vadd.f32 %v944, %v955
      %v1014 = vadd.f32 %v945, %v955
      %v1015 = vadd.f32 %v946, %v955
      %v1016 = vadd.f32 %v947, %v955
      %v1017 = vadd.f32 %v948, %v955
      %v1018 = vadd.f32 %v949, %v955
      %v1019 = vadd.f32 %v950, %v955
      %v1020 = vmul.f32 %v956, 0.01
      %v1021 = vmul.f32 %v957, 0.01
      %v1022 = vmul.f32 %v958, 0.01
      %v1023 = vmul.f32 %v959, 0.01
      %v1024 = vmul.f32 %v960, 0.01
      %v1025 = vmul.f32 %v961, 0.01
      %v1026 = vmul.f32 %v962, 0.01
      %v1027 = vmul.f32 %v963, 0.01
      %v1028 = vmul.f32 %v964, 0.01
      %v1029 = vmul.f32 %v965, 0.01
      %v1030 = vmul.f32 %v966, 0.01
      %v1031 = vmul.f32 %v967, 0.01
      %v1032 = vmul.f32 %v968, 0.01
      %v1033 = vmul.f32 %v969, 0.01
      %v1034 = vmul.f32 %v970, 0.01
      %v1035 = vmul.f32 %v971, 0.01
      %v1036 = vmul.f32 %v972, 0.01
      %v1037 = vmul.f32 %v973, 0.01
      %v1038 = vmul.f32 %v974, 0.01
      %v1039 = vmul.f32 %v975, 0.01
      %v1040 = vmul.f32 %v976, 0.01
      %v1041 = vmul.f32 %v977, 0.01
      %v1042 = vmul.f32 %v978, 0.01
      %v1043 = vmul.f32 %v979, 0.01
      %v1044 = vmul.f32 %v980, 0.01
      %v1045 = vmul.f32 %v981, 0.01
      %v1046 = vmul.f32 %v982, 0.01
      %v1047 = vmul.f32 %v983, 0.01
      %v1048 = vmul.f32 %v984, 0.01
      %v1049 = vmul.f32 %v985, 0.01
      %v1050 = vmul.f32 %v986, 0.01
      %v1051 = vmul.f32 %v987, 0.01
      %v1052 = vmul.f32 %v988, 0.01
      %v1053 = vmul.f32 %v989, 0.01
      %v1054 = vmul.f32 %v990, 0.01
      %v1055 = vmul.f32 %v991, 0.01
      %v1056 = vmul.f32 %v992, 0.01
      %v1057 = vmul.f32 %v993, 0.01
      %v1058 = vmul.f32 %v994, 0.01
      %v1059 = vmul.f32 %v995, 0.01
      %v1060 = vmul.f32 %v996, 0.01
      %v1061 = vmul.f32 %v997, 0.01
      %v1062 = vmul.f32 %v998, 0.01
      %v1063 = vmul.f32 %v999, 0.01
      %v1064 = vmul.f32 %v1000, 0.01
      %v1065 = vmul.f32 %v1001, 0.01
      %v1066 = vmul.f32 %v1002, 0.01
      %v1067 = vmul.f32 %v1003, 0.01
      %v1068 = vmul.f32 %v1004, 0.01
      %v1069 = vmul.f32 %v1005, 0.01
      %v1070 = vmul.f32 %v1006, 0.01
      %v1071 = vmul.f32 %v1007, 0.01
      %v1072 = vmul.f32 %v1008, 0.01
      %v1073 = vmul.f32 %v1009, 0.01
      %v1074 = vmul.f32 %v1010, 0.01
      %v1075 = vmul.f32 %v1011, 0.01
      %v1076 = vmul.f32 %v1012, 0.01
      %v1077 = vmul.f32 %v1013, 0.01
      %v1078 = vmul.f32 %v1014, 0.01
      %v1079 = vmul.f32 %v1015, 0.01
      %v1080 = vmul.f32 %v1016, 0.01
      %v1081 = vmul.f32 %v1017, 0.01
      %v1082 = vmul.f32 %v1018, 0.01
      %v1083 = vmul.f32 %v1019, 0.01
      %v1084 = vmax.f32 %v956, %v1020
      %v1085 = vmax.f32 %v957, %v1021
      %v1086 = vmax.f32 %v958, %v1022
      %v1087 = vmax.f32 %v959, %v1023
      %v1088 = vmax.f32 %v960, %v1024
      %v1089 = vmax.f32 %v961, %v1025
      %v1090 = vmax.f32 %v962, %v1026
      %v1091 = vmax.f32 %v963, %v1027
      %v1092 = vmax.f32 %v964, %v1028
      %v1093 = vmax.f32 %v965, %v1029
      %v1094 = vmax.f32 %v966, %v1030
      %v1095 = vmax.f32 %v967, %v1031
      %v1096 = vmax.f32 %v968, %v1032
      %v1097 = vmax.f32 %v969, %v1033
      %v1098 = vmax.f32 %v970, %v1034
      %v1099 = vmax.f32 %v971, %v1035
      %v1100 = vmax.f32 %v972, %v1036
      %v1101 = vmax.f32 %v973, %v1037
      %v1102 = vmax.f32 %v974, %v1038
      %v1103 = vmax.f32 %v975, %v1039
      %v1104 = vmax.f32 %v976, %v1040
      %v1105 = vmax.f32 %v977, %v1041
      %v1106 = vmax.f32 %v978, %v1042
      %v1107 = vmax.f32 %v979, %v1043
      %v1108 = vmax.f32 %v980, %v1044
      %v1109 = vmax.f32 %v981, %v1045
      %v1110 = vmax.f32 %v982, %v1046
      %v1111 = vmax.f32 %v983, %v1047
      %v1112 = vmax.f32 %v984, %v1048
      %v1113 = vmax.f32 %v985, %v1049
      %v1114 = vmax.f32 %v986, %v1050
      %v1115 = vmax.f32 %v987, %v1051
      %v1116 = vmax.f32 %v988, %v1052
      %v1117 = vmax.f32 %v989, %v1053
      %v1118 = vmax.f32 %v990, %v1054
      %v1119 = vmax.f32 %v991, %v1055
      %v1120 = vmax.f32 %v992, %v1056
      %v1121 = vmax.f32 %v993, %v1057
      %v1122 = vmax.f32 %v994, %v1058
      %v1123 = vmax.f32 %v995, %v1059
      %v1124 = vmax.f32 %v996, %v1060
      %v1125 = vmax.f32 %v997, %v1061
      %v1126 = vmax.f32 %v998, %v1062
      %v1127 = vmax.f32 %v999, %v1063
      %v1128 = vmax.f32 %v1000, %v1064
      %v1129 = vmax.f32 %v1001, %v1065
      %v1130 = vmax.f32 %v1002, %v1066
      %v1131 = vmax.f32 %v1003, %v1067
      %v1132 = vmax.f32 %v1004, %v1068
      %v1133 = vmax.f32 %v1005, %v1069
      %v1134 = vmax.f32 %v1006, %v1070
      %v1135 = vmax.f32 %v1007, %v1071
      %v1136 = vmax.f32 %v1008, %v1072
      %v1137 = vmax.f32 %v1009, %v1073
      %v1138 = vmax.f32 %v1010, %v1074
      %v1139 = vmax.f32 %v1011, %v1075
      %v1140 = vmax.f32 %v1012, %v1076
      %v1141 = vmax.f32 %v1013, %v1077
      %v1142 = vmax.f32 %v1014, %v1078
      %v1143 = vmax.f32 %v1015, %v1079
      %v1144 = vmax.f32 %v1016, %v1080
      %v1145 = vmax.f32 %v1017, %v1081
      %v1146 = vmax.f32 %v1018, %v1082
      %v1147 = vmax.f32 %v1019, %v1083
      %v1148 = vpack.c.bf16 %v1085, %v1084
      %v1149 = vpack.c.bf16 %v1087, %v1086
      %v1150 = vpack.c.bf16 %v1089, %v1088
      %v1151 = vpack.c.bf16 %v1091, %v1090
      %v1152 = vpack.c.bf16 %v1093, %v1092
      %v1153 = vpack.c.bf16 %v1095, %v1094
      %v1154 = vpack.c.bf16 %v1097, %v1096
      %v1155 = vpack.c.bf16 %v1099, %v1098
      %v1156 = vpack.c.bf16 %v1101, %v1100
      %v1157 = vpack.c.bf16 %v1103, %v1102
      %v1158 = vpack.c.bf16 %v1105, %v1104
      %v1159 = vpack.c.bf16 %v1107, %v1106
      %v1160 = vpack.c.bf16 %v1109, %v1108
      %v1161 = vpack.c.bf16 %v1111, %v1110
      %v1162 = vpack.c.bf16 %v1113, %v1112
      %v1163 = vpack.c.bf16 %v1115, %v1114
      %v1164 = vpack.c.bf16 %v1117, %v1116
      %v1165 = vpack.c.bf16 %v1119, %v1118
      %v1166 = vpack.c.bf16 %v1121, %v1120
      %v1167 = vpack.c.bf16 %v1123, %v1122
      %v1168 = vpack.c.bf16 %v1125, %v1124
      %v1169 = vpack.c.bf16 %v1127, %v1126
      %v1170 = vpack.c.bf16 %v1129, %v1128
      %v1171 = vpack.c.bf16 %v1131, %v1130
      %v1172 = vpack.c.bf16 %v1133, %v1132
      %v1173 = vpack.c.bf16 %v1135, %v1134
      %v1174 = vpack.c.bf16 %v1137, %v1136
      %v1175 = vpack.c.bf16 %v1139, %v1138
      %v1176 = vpack.c.bf16 %v1141, %v1140
      %v1177 = vpack.c.bf16 %v1143, %v1142
      %v1178 = vpack.c.bf16 %v1145, %v1144
      %v1179 = vpack.c.bf16 %v1147, %v1146
      %v1212 = vunpack.c.l.b16 %v1148
      %v1213 = vunpack.c.h.b16 %v1148
      %v1214 = vunpack.c.l.b16 %v1149
      %v1215 = vunpack.c.h.b16 %v1149
      %v1216 = vunpack.c.l.b16 %v1150
      %v1217 = vunpack.c.h.b16 %v1150
      %v1218 = vunpack.c.l.b16 %v1151
      %v1219 = vunpack.c.h.b16 %v1151
      %v1220 = vunpack.c.l.b16 %v1152
      %v1221 = vunpack.c.h.b16 %v1152
      %v1222 = vunpack.c.l.b16 %v1153
      %v1223 = vunpack.c.h.b16 %v1153
      %v1224 = vunpack.c.l.b16 %v1154
      %v1225 = vunpack.c.h.b16 %v1154
      %v1226 = vunpack.c.l.b16 %v1155
      %v1227 = vunpack.c.h.b16 %v1155
      %v1228 = vunpack.c.l.b16 %v1156
      %v1229 = vunpack.c.h.b16 %v1156
      %v1230 = vunpack.c.l.b16 %v1157
      %v1231 = vunpack.c.h.b16 %v1157
      %v1232 = vunpack.c.l.b16 %v1158
      %v1233 = vunpack.c.h.b16 %v1158
      %v1234 = vunpack.c.l.b16 %v1159
      %v1235 = vunpack.c.h.b16 %v1159
      %v1236 = vunpack.c.l.b16 %v1160
      %v1237 = vunpack.c.h.b16 %v1160
      %v1238 = vunpack.c.l.b16 %v1161
      %v1239 = vunpack.c.h.b16 %v1161
      %v1240 = vunpack.c.l.b16 %v1162
      %v1241 = vunpack.c.h.b16 %v1162
      %v1242 = vunpack.c.l.b16 %v1163
      %v1243 = vunpack.c.h.b16 %v1163
      %v1244 = vunpack.c.l.b16 %v1164
      %v1245 = vunpack.c.h.b16 %v1164
      %v1246 = vunpack.c.l.b16 %v1165
      %v1247 = vunpack.c.h.b16 %v1165
      %v1248 = vunpack.c.l.b16 %v1166
      %v1249 = vunpack.c.h.b16 %v1166
      %v1250 = vunpack.c.l.b16 %v1167
      %v1251 = vunpack.c.h.b16 %v1167
      %v1252 = vunpack.c.l.b16 %v1168
      %v1253 = vunpack.c.h.b16 %v1168
      %v1254 = vunpack.c.l.b16 %v1169
      %v1255 = vunpack.c.h.b16 %v1169
      %v1256 = vunpack.c.l.b16 %v1170
      %v1257 = vunpack.c.h.b16 %v1170
      %v1258 = vunpack.c.l.b16 %v1171
      %v1259 = vunpack.c.h.b16 %v1171
      %v1260 = vunpack.c.l.b16 %v1172
      %v1261 = vunpack.c.h.b16 %v1172
      %v1262 = vunpack.c.l.b16 %v1173
      %v1263 = vunpack.c.h.b16 %v1173
      %v1264 = vunpack.c.l.b16 %v1174
      %v1265 = vunpack.c.h.b16 %v1174
      %v1266 = vunpack.c.l.b16 %v1175
      %v1267 = vunpack.c.h.b16 %v1175
      %v1268 = vunpack.c.l.b16 %v1176
      %v1269 = vunpack.c.h.b16 %v1176
      %v1270 = vunpack.c.l.b16 %v1177
      %v1271 = vunpack.c.h.b16 %v1177
      %v1272 = vunpack.c.l.b16 %v1178
      %v1273 = vunpack.c.h.b16 %v1178
      %v1274 = vunpack.c.l.b16 %v1179
      %v1275 = vunpack.c.h.b16 %v1179
      %v1276 = vpack.c.b16 %v1212, %v1212
      %v1277 = vpack.c.b16 %v1213, %v1213
      %v1278 = vpack.c.b16 %v1214, %v1214
      %v1279 = vpack.c.b16 %v1215, %v1215
      %v1280 = vpack.c.b16 %v1216, %v1216
      %v1281 = vpack.c.b16 %v1217, %v1217
      %v1282 = vpack.c.b16 %v1218, %v1218
      %v1283 = vpack.c.b16 %v1219, %v1219
      %v1284 = vpack.c.b16 %v1220, %v1220
      %v1285 = vpack.c.b16 %v1221, %v1221
      %v1286 = vpack.c.b16 %v1222, %v1222
      %v1287 = vpack.c.b16 %v1223, %v1223
      %v1288 = vpack.c.b16 %v1224, %v1224
      %v1289 = vpack.c.b16 %v1225, %v1225
      %v1290 = vpack.c.b16 %v1226, %v1226
      %v1291 = vpack.c.b16 %v1227, %v1227
      %v1292 = vpack.c.b16 %v1228, %v1228
      %v1293 = vpack.c.b16 %v1229, %v1229
      %v1294 = vpack.c.b16 %v1230, %v1230
      %v1295 = vpack.c.b16 %v1231, %v1231
      %v1296 = vpack.c.b16 %v1232, %v1232
      %v1297 = vpack.c.b16 %v1233, %v1233
      %v1298 = vpack.c.b16 %v1234, %v1234
      %v1299 = vpack.c.b16 %v1235, %v1235
      %v1300 = vpack.c.b16 %v1236, %v1236
      %v1301 = vpack.c.b16 %v1237, %v1237
      %v1302 = vpack.c.b16 %v1238, %v1238
      %v1303 = vpack.c.b16 %v1239, %v1239
      %v1304 = vpack.c.b16 %v1240, %v1240
      %v1305 = vpack.c.b16 %v1241, %v1241
      %v1306 = vpack.c.b16 %v1242, %v1242
      %v1307 = vpack.c.b16 %v1243, %v1243
      %v1308 = vpack.c.b16 %v1244, %v1244
      %v1309 = vpack.c.b16 %v1245, %v1245
      %v1310 = vpack.c.b16 %v1246, %v1246
      %v1311 = vpack.c.b16 %v1247, %v1247
      %v1312 = vpack.c.b16 %v1248, %v1248
      %v1313 = vpack.c.b16 %v1249, %v1249
      %v1314 = vpack.c.b16 %v1250, %v1250
      %v1315 = vpack.c.b16 %v1251, %v1251
      %v1316 = vpack.c.b16 %v1252, %v1252
      %v1317 = vpack.c.b16 %v1253, %v1253
      %v1318 = vpack.c.b16 %v1254, %v1254
      %v1319 = vpack.c.b16 %v1255, %v1255
      %v1320 = vpack.c.b16 %v1256, %v1256
      %v1321 = vpack.c.b16 %v1257, %v1257
      %v1322 = vpack.c.b16 %v1258, %v1258
      %v1323 = vpack.c.b16 %v1259, %v1259
      %v1324 = vpack.c.b16 %v1260, %v1260
      %v1325 = vpack.c.b16 %v1261, %v1261
      %v1326 = vpack.c.b16 %v1262, %v1262
      %v1327 = vpack.c.b16 %v1263, %v1263
      %v1328 = vpack.c.b16 %v1264, %v1264
      %v1329 = vpack.c.b16 %v1265, %v1265
      %v1330 = vpack.c.b16 %v1266, %v1266
      %v1331 = vpack.c.b16 %v1267, %v1267
      %v1332 = vpack.c.b16 %v1268, %v1268
      %v1333 = vpack.c.b16 %v1269, %v1269
      %v1334 = vpack.c.b16 %v1270, %v1270
      %v1335 = vpack.c.b16 %v1271, %v1271
      %v1336 = vpack.c.b16 %v1272, %v1272
      %v1337 = vpack.c.b16 %v1273, %v1273
      %v1338 = vpack.c.b16 %v1274, %v1274
      %v1339 = vpack.c.b16 %v1275, %v1275
      %1404 = vst [vmem:[%s213] sm:$0xf] %v1276
      %1405 = vst [vmem:[%s213 + $0x4] sm:$0xf] %v1277
      %1406 = vst [vmem:[%s213 + $0x8] sm:$0xf] %v1278
      %1407 = vst [vmem:[%s213 + $0xc] sm:$0xf] %v1279
      %1408 = vst [vmem:[%s213 + $0x10] sm:$0xf] %v1280
      %1409 = vst [vmem:[%s213 + $0x14] sm:$0xf] %v1281
      %1410 = vst [vmem:[%s213 + $0x18] sm:$0xf] %v1282
      %1411 = vst [vmem:[%s213 + $0x1c] sm:$0xf] %v1283
      %1412 = vst [vmem:[%s213 + $0x20] sm:$0xf] %v1284
      %1413 = vst [vmem:[%s213 + $0x24] sm:$0xf] %v1285
      %1414 = vst [vmem:[%s213 + $0x28] sm:$0xf] %v1286
      %1415 = vst [vmem:[%s213 + $0x2c] sm:$0xf] %v1287
      %1416 = vst [vmem:[%s213 + $0x30] sm:$0xf] %v1288
      %1417 = vst [vmem:[%s213 + $0x34] sm:$0xf] %v1289
      %1418 = vst [vmem:[%s213 + $0x38] sm:$0xf] %v1290
      %1419 = vst [vmem:[%s213 + $0x3c] sm:$0xf] %v1291
      %1420 = vst [vmem:[%s213 + $0x40] sm:$0xf] %v1292
      %1421 = vst [vmem:[%s213 + $0x44] sm:$0xf] %v1293
      %1422 = vst [vmem:[%s213 + $0x48] sm:$0xf] %v1294
      %1423 = vst [vmem:[%s213 + $0x4c] sm:$0xf] %v1295
      %1424 = vst [vmem:[%s213 + $0x50] sm:$0xf] %v1296
      %1425 = vst [vmem:[%s213 + $0x54] sm:$0xf] %v1297
      %1426 = vst [vmem:[%s213 + $0x58] sm:$0xf] %v1298
      %1427 = vst [vmem:[%s213 + $0x5c] sm:$0xf] %v1299
      %1428 = vst [vmem:[%s213 + $0x60] sm:$0xf] %v1300
      %1429 = vst [vmem:[%s213 + $0x64] sm:$0xf] %v1301
      %1430 = vst [vmem:[%s213 + $0x68] sm:$0xf] %v1302
      %1431 = vst [vmem:[%s213 + $0x6c] sm:$0xf] %v1303
      %1432 = vst [vmem:[%s213 + $0x70] sm:$0xf] %v1304
      %1433 = vst [vmem:[%s213 + $0x74] sm:$0xf] %v1305
      %1434 = vst [vmem:[%s213 + $0x78] sm:$0xf] %v1306
      %1435 = vst [vmem:[%s213 + $0x7c] sm:$0xf] %v1307
      %1436 = vst [vmem:[%s213 + $0x80] sm:$0xf] %v1308
      %1437 = vst [vmem:[%s213 + $0x84] sm:$0xf] %v1309
      %1438 = vst [vmem:[%s213 + $0x88] sm:$0xf] %v1310
      %1439 = vst [vmem:[%s213 + $0x8c] sm:$0xf] %v1311
      %1440 = vst [vmem:[%s213 + $0x90] sm:$0xf] %v1312
      %1441 = vst [vmem:[%s213 + $0x94] sm:$0xf] %v1313
      %1442 = vst [vmem:[%s213 + $0x98] sm:$0xf] %v1314
      %1443 = vst [vmem:[%s213 + $0x9c] sm:$0xf] %v1315
      %1444 = vst [vmem:[%s213 + $0xa0] sm:$0xf] %v1316
      %1445 = vst [vmem:[%s213 + $0xa4] sm:$0xf] %v1317
      %1446 = vst [vmem:[%s213 + $0xa8] sm:$0xf] %v1318
      %1447 = vst [vmem:[%s213 + $0xac] sm:$0xf] %v1319
      %1448 = vst [vmem:[%s213 + $0xb0] sm:$0xf] %v1320
      %1449 = vst [vmem:[%s213 + $0xb4] sm:$0xf] %v1321
      %1450 = vst [vmem:[%s213 + $0xb8] sm:$0xf] %v1322
      %1451 = vst [vmem:[%s213 + $0xbc] sm:$0xf] %v1323
      %1452 = vst [vmem:[%s213 + $0xc0] sm:$0xf] %v1324
      %1453 = vst [vmem:[%s213 + $0xc4] sm:$0xf] %v1325
      %1454 = vst [vmem:[%s213 + $0xc8] sm:$0xf] %v1326
      %1455 = vst [vmem:[%s213 + $0xcc] sm:$0xf] %v1327
      %1456 = vst [vmem:[%s213 + $0xd0] sm:$0xf] %v1328
      %1457 = vst [vmem:[%s213 + $0xd4] sm:$0xf] %v1329
      %1458 = vst [vmem:[%s213 + $0xd8] sm:$0xf] %v1330
      %1459 = vst [vmem:[%s213 + $0xdc] sm:$0xf] %v1331
      %1460 = vst [vmem:[%s213 + $0xe0] sm:$0xf] %v1332
      %1461 = vst [vmem:[%s213 + $0xe4] sm:$0xf] %v1333
      %1462 = vst [vmem:[%s213 + $0xe8] sm:$0xf] %v1334
      %1463 = vst [vmem:[%s213 + $0xec] sm:$0xf] %v1335
      %1464 = vst [vmem:[%s213 + $0xf0] sm:$0xf] %v1336
      %1465 = vst [vmem:[%s213 + $0xf4] sm:$0xf] %v1337
      %1466 = vst [vmem:[%s213 + $0xf8] sm:$0xf] %v1338
      %1467 = vst [vmem:[%s213 + $0xfc] sm:$0xf] %v1339
      %s1468 = smul.u32 8, %s19
      %p1469 = scmp.lt.s32.totalorder %s18, 1
      %s1470 = scalar_select %p1469, %s18, 1
      %p1471 = scmp.lt.s32.totalorder %s1468, 7
      %s1472 = scalar_select %p1471, %s1468, 7
      %s1473 = smul.addr %s1472, 8
      %s1474 = smul.addr %s1470, 64
      %s1475 = sadd.s32 %s1473, %s1474
      %s1476 = smul.addr %s1475, 4
      %s1477 = scalar_lea.vmem %s3, %s1476
      // Predicated region
      $region33: #{conv_block_forward.2} parent=31 // pred_check
        %p1478 = pneg %p116
      $region34: #{conv_block_forward.2} parent=31 // pred_check_branch
        %1480 = sbr.rel (%p1478) target = $region36
      $region35: #{conv_block_forward.2} parent=31 // pred_region
        %s1481 = smul.u32 8, %s19
      $region36: #{conv_block_forward.2} parent=31 // pred_fallthru
        _
    $region32: #{conv_block_forward.2} parent=5 // pred_fallthru
      _
    %p1482 = scmp.le.s32.totalorder 2, %s9
    // Predicated region
    $region37: #{conv_block_forward.2} parent=5 // pred_check
      %p1483 = pneg %p1482
    $region38: #{conv_block_forward.2} parent=5 // pred_check_branch
      %1485 = sbr.rel (%p1483) target = $region40
    $region39: #{conv_block_forward.2} parent=5 // pred_region
      %s1486 = ssub.s32 %s9, 2
      // Predicated region
      $region41: #{conv_block_forward.2} parent=39 // pred_check
        %p1487 = pneg %p122
      $region42: #{conv_block_forward.2} parent=39 // pred_check_branch
        %1489 = sbr.rel (%p1487) target = $region44
      $region43: #{conv_block_forward.2} parent=39 // pred_region
        %s1490 = smul.u32 8, %s21
        %p1491 = scmp.lt.s32.totalorder %s20, 1
        %s1492 = scalar_select %p1491, %s20, 1
        %p1493 = scmp.lt.s32.totalorder %s1490, 7
        %s1494 = scalar_select %p1493, %s1490, 7
        %s1495 = smul.addr %s1494, 8
        %s1496 = smul.addr %s1492, 64
        %s1497 = sadd.s32 %s1495, %s1496
        %s1498 = smul.addr %s1497, 4
        %s1499 = scalar_lea.vmem %s3, %s1498
      $region44: #{conv_block_forward.2} parent=39 // pred_fallthru
        _
    $region40: #{conv_block_forward.2} parent=5 // pred_fallthru
      _
  $region6: #{conv_block_forward.2} parent=0 // loop_footer
    %s13 = sadd.s32 1, %s9
  $region7: #{conv_block_forward.2} parent=0 // loop_footer_branch
    %8 = sbr.rel target = $region3
  $region8: #{conv_block_forward.2} parent=0 // loop_exit
    _

// kernel: conv_block_forward.3
$region0: #{conv_block_forward.3}
  #allocation0 [shape = 'u32[]', space=smem, size = 0x4, offset = 0x4, fixed_abs, tag = 'smem constant byte address 0x4 - core index']
  #allocation1 [shape = 'u32[144,128]{1,0:T(1,128)}', space=vmem, size = 0x12000, scoped, tag = 'internal scratch']
  %s0 = inlined_call_operand.vmem [shape: bf16[2,8,64,224], index: 0, kind: input, shape index: {}]
  %s1 = inlined_call_operand.vmem [shape: bf16[224,128], index: 1, kind: input, shape index: {}]
  %s2 = inlined_call_operand.vmem [shape: f32[2,128], index: 2, kind: input, shape index: {}]
  %s3 = inlined_call_operand.vmem [shape: f32[2,8,64,128], index: 3, kind: output, shape index: {}]
  %s4 = sld [smem:[#allocation0]]
  $region45: #{conv_block_forward.3} parent=0
    _
  %s6 = ssub.s32 1, %s4
  %s7 = scalar_select 0, %s6, %s4
  loop: start=0, step=1, limit=4
  $region2: #{conv_block_forward.3} parent=0 // loop_pre_header
    _
  $region3: #{conv_block_forward.3} parent=0 // loop_header
    %s9 = sphi 0, %s13
    %p10 = scmp.ge.s32.totalorder %s9, 4
    %s16 = sphi 0, %s28
    %s17 = sphi 0, %s24
    %s18 = sphi 0, %s16
    %s19 = sphi 0, %s17
    %s20 = sphi 0, %s18
    %s21 = sphi 0, %s19
    %s33 = sphi 0, %s35
    %s36 = sphi 0, %s33
    %s37 = sphi 0, %s36
    %s53 = sphi 0, %s37
    %s57 = sphi 0, %s57
    %s59 = sphi 0, %s57
    %s60 = sphi 0, %s59
    %s74 = sphi 0, %s60
    %s78 = sphi 0, %s78
    %s80 = sphi 0, %s78
    %s81 = sphi 0, %s80
    %s95 = sphi 0, %s81
    %s103 = sphi 0, %s105
    %s106 = sphi 0, %s103
    %s107 = sphi 0, %s106
    %s123 = sphi 0, %s107
  $region4: #{conv_block_forward.3} parent=0 // loop_header_branch
    %12 = sbr.rel (%p10) target = $region8
  $region5: #{conv_block_forward.3} parent=0 // loop_body
    %s14 = ssub.s32 %s9, 1
    %s15 = ssub.s32 %s9, 2
    %s22 = sadd.s32 1, %s17
    %p23 = scmp.ge.s32.totalorder %s22, 1
    %s24 = scalar_select %p23, 0, %s22
    %s25 = sadd.s32 1, %s16
    %s26 = scalar_select %p23, %s25, %s16
    %p27 = scmp.ge.s32.totalorder %s26, 2
    %s28 = scalar_select %p27, 0, %s26
    %s29 = ssub.s32 %s16, %s28
    %s30 = ssub.s32 %s17, %s24
    %s31 = sor.u32 %s29, %s30
    %p32 = scmp.eq.s32.totalorder %s31, 0
    %s34 = sadd.s32 %s33, 1
    %s35 = scalar_select %p32, %s33, %s34
    %p38 = pneg %p32
    %p39 = scmp.eq.s32.totalorder %s9, 1
    %p40 = por %p38, %p39
    %p41 = scmp.ne.s32.totalorder %s33, %s36
    %p42 = scmp.eq.s32.totalorder %s9, 0
    %p43 = por %p41, %p42
    %p44 = scmp.ne.s32.totalorder %s33, %s36
    %p45 = scmp.eq.s32.totalorder %s14, 1
    %p46 = por %p44, %p45
    %p47 = scmp.ne.s32.totalorder %s36, %s37
    %p48 = scmp.eq.s32.totalorder %s14, 0
    %p49 = por %p47, %p48
    %p50 = scmp.ne.s32.totalorder %s36, %s37
    %p51 = scmp.eq.s32.totalorder %s15, 1
    %p52 = por %p50, %p51
    %p54 = scmp.ne.s32.totalorder %s37, %s53
    %p55 = scmp.eq.s32.totalorder %s15, 0
    %p56 = por %p54, %p55
    %s58 = sadd.s32 %s57, 1
    %p61 = scmp.eq.s32.totalorder %s9, 1
    %p62 = scmp.ne.s32.totalorder %s57, %s59
    %p63 = scmp.eq.s32.totalorder %s9, 0
    %p64 = por %p62, %p63
    %p65 = scmp.ne.s32.totalorder %s57, %s59
    %p66 = scmp.eq.s32.totalorder %s14, 1
    %p67 = por %p65, %p66
    %p68 = scmp.ne.s32.totalorder %s59, %s60
    %p69 = scmp.eq.s32.totalorder %s14, 0
    %p70 = por %p68, %p69
    %p71 = scmp.ne.s32.totalorder %s59, %s60
    %p72 = scmp.eq.s32.totalorder %s15, 1
    %p73 = por %p71, %p72
    %p75 = scmp.ne.s32.totalorder %s60, %s74
    %p76 = scmp.eq.s32.totalorder %s15, 0
    %p77 = por %p75, %p76
    %s79 = sadd.s32 %s78, 1
    %p82 = scmp.eq.s32.totalorder %s9, 1
    %p83 = scmp.ne.s32.totalorder %s78, %s80
    %p84 = scmp.eq.s32.totalorder %s9, 0
    %p85 = por %p83, %p84
    %p86 = scmp.ne.s32.totalorder %s78, %s80
    %p87 = scmp.eq.s32.totalorder %s14, 1
    %p88 = por %p86, %p87
    %p89 = scmp.ne.s32.totalorder %s80, %s81
    %p90 = scmp.eq.s32.totalorder %s14, 0
    %p91 = por %p89, %p90
    %p92 = scmp.ne.s32.totalorder %s80, %s81
    %p93 = scmp.eq.s32.totalorder %s15, 1
    %p94 = por %p92, %p93
    %p96 = scmp.ne.s32.totalorder %s81, %s95
    %p97 = scmp.eq.s32.totalorder %s15, 0
    %p98 = por %p96, %p97
    %s99 = ssub.s32 %s16, %s28
    %s100 = ssub.s32 %s17, %s24
    %s101 = sor.u32 %s99, %s100
    %p102 = scmp.eq.s32.totalorder %s101, 0
    %s104 = sadd.s32 %s103, 1
    %s105 = scalar_select %p102, %s103, %s104
    %p108 = pneg %p102
    %p109 = scmp.eq.s32.totalorder %s9, 1
    %p110 = por %p108, %p109
    %p111 = scmp.ne.s32.totalorder %s103, %s106
    %p112 = scmp.eq.s32.totalorder %s9, 0
    %p113 = por %p111, %p112
    %p114 = scmp.ne.s32.totalorder %s103, %s106
    %p115 = scmp.eq.s32.totalorder %s14, 1
    %p116 = por %p114, %p115
    %p117 = scmp.ne.s32.totalorder %s106, %s107
    %p118 = scmp.eq.s32.totalorder %s14, 0
    %p119 = por %p117, %p118
    %p120 = scmp.ne.s32.totalorder %s106, %s107
    %p121 = scmp.eq.s32.totalorder %s15, 1
    %p122 = por %p120, %p121
    %p124 = scmp.ne.s32.totalorder %s107, %s123
    %p125 = scmp.eq.s32.totalorder %s15, 0
    %p126 = por %p124, %p125
    %p127 = scmp.le.s32.totalorder 1, %s9
    %p128 = scmp.lt.s32.totalorder %s9, 3
    %p129 = pnand %p127, %p128
    %p130 = pneg %p129
    // Predicated region
    $region9: #{conv_block_forward.3} parent=5 // pred_check
      _
    $region10: #{conv_block_forward.3} parent=5 // pred_check_branch
      %132 = sbr.rel (%p129) target = $region12
    $region11: #{conv_block_forward.3} parent=5 // pred_region
      %s133 = ssub.s32 %s9, 1
      // Predicated region
      $region13: #{conv_block_forward.3} parent=11 // pred_check
        %p134 = pneg %p70
      $region14: #{conv_block_forward.3} parent=11 // pred_check_branch
        %136 = sbr.rel (%p134) target = $region16
      $region15: #{conv_block_forward.3} parent=11 // pred_region
        _
      $region16: #{conv_block_forward.3} parent=11 // pred_fallthru
        _
      // Predicated region
      $region17: #{conv_block_forward.3} parent=11 // pred_check
        %p137 = pneg %p91
      $region18: #{conv_block_forward.3} parent=11 // pred_check_branch
        %139 = sbr.rel (%p137) target = $region20
      $region19: #{conv_block_forward.3} parent=11 // pred_region
        _
      $region20: #{conv_block_forward.3} parent=11 // pred_fallthru
        _
    $region12: #{conv_block_forward.3} parent=5 // pred_fallthru
      _
    %p140 = scmp.lt.s32.totalorder %s9, 2
    // Predicated region
    $region21: #{conv_block_forward.3} parent=5 // pred_check
      %p141 = pneg %p140
    $region22: #{conv_block_forward.3} parent=5 // pred_check_branch
      %143 = sbr.rel (%p141) target = $region24
    $region23: #{conv_block_forward.3} parent=5 // pred_region
      // Predicated region
      $region25: #{conv_block_forward.3} parent=23 // pred_check
        %p144 = pneg %p43
      $region26: #{conv_block_forward.3} parent=23 // pred_check_branch
        %146 = sbr.rel (%p144) target = $region28
      $region27: #{conv_block_forward.3} parent=23 // pred_region
        %s147 = smul.u32 8, %s17
        %p148 = scmp.lt.s32.totalorder %s16, 1
        %s149 = scalar_select %p148, %s16, 1
        %p150 = scmp.lt.s32.totalorder %s147, 7
        %s151 = scalar_select %p150, %s147, 7
        %s152 = smul.addr %s151, 16
        %s153 = smul.addr %s149, 128
        %s154 = sadd.s32 %s152, %s153
        %s155 = smul.addr %s154, 4
        %s156 = scalar_lea.vmem %s0, %s155
        %s157 = smul.u32 8, %s17
      $region28: #{conv_block_forward.3} parent=23 // pred_fallthru
        _
    $region24: #{conv_block_forward.3} parent=5 // pred_fallthru
      _
    %p158 = scmp.le.s32.totalorder 1, %s9
    %p159 = scmp.lt.s32.totalorder %s9, 3
    %p160 = pnand %p158, %p159
    %p161 = pneg %p160
    // Predicated region
    $region29: #{conv_block_forward.3} parent=5 // pred_check
      _
    $region30: #{conv_block_forward.3} parent=5 // pred_check_branch
      %163 = sbr.rel (%p160) target = $region32
    $region31: #{conv_block_forward.3} parent=5 // pred_region
      %s164 = ssub.s32 %s9, 1
      %s165 = smul.u32 8, %s19
      %p166 = scmp.lt.s32.totalorder %s18, 1
      %s167 = scalar_select %p166, %s18, 1
      %p168 = scmp.lt.s32.totalorder %s165, 7
      %s169 = scalar_select %p168, %s165, 7
      %s170 = smul.addr %s169, 16
      %s171 = smul.addr %s167, 128
      %s172 = sadd.s32 %s170, %s171
      %s173 = smul.addr %s172, 4
      %s174 = scalar_lea.vmem %s0, %s173
      %p175 = pneg %p49
      %p176 = pneg %p46
      %p177 = pneg %p70
      %p178 = pneg %p67
      %p179 = pneg %p91
      %p180 = pneg %p88
      %p181 = pneg %p119
      %p182 = pneg %p116
      %s183 = smul.u32 8, %s19
      %p184 = scmp.lt.s32.totalorder %s18, 1
      %s185 = scalar_select %p184, %s18, 1
      %p186 = scmp.lt.s32.totalorder %s183, 7
      %s187 = scalar_select %p186, %s183, 7
      %s188 = smul.addr %s187, 8
      %s189 = smul.addr %s185, 64
      %s190 = sadd.s32 %s188, %s189
      %s191 = smul.addr %s190, 8
      %s192 = scalar_lea.vmem %s3, %s191
      %s193 = smul.u32 8, %s19
      %p194 = scmp.lt.s32.totalorder %s18, 1
      %s195 = scalar_select %p194, %s18, 1
      %p196 = scmp.lt.s32.totalorder %s193, 7
      %s197 = scalar_select %p196, %s193, 7
      %s198 = smul.addr %s197, 16
      %s199 = smul.addr %s195, 128
      %s200 = sadd.s32 %s198, %s199
      %s201 = smul.addr %s200, 4
      %s202 = scalar_lea.vmem %s0, %s201
      %s203 = smul.u32 8, %s19
      %s204 = smul.u32 8, %s19
      %p205 = scmp.lt.s32.totalorder %s18, 1
      %s206 = scalar_select %p205, %s18, 1
      %p207 = scmp.lt.s32.totalorder %s204, 7
      %s208 = scalar_select %p207, %s204, 7
      %s209 = smul.addr %s208, 8
      %s210 = smul.addr %s206, 64
      %s211 = sadd.s32 %s209, %s210
      %s212 = smul.addr %s211, 8
      %s213 = scalar_lea.vmem %s3, %s212
      %s214 = smul.u32 8, %s19
      %v216 = vld [vmem:[%s202] sm:$0xff]
      %v217 = vld [vmem:[%s202 + $0x8] sm:$0xff]
      %v218 = vld [vmem:[%s202 + $0x10] sm:$0xff]
      %v219 = vld [vmem:[%s202 + $0x18] sm:$0xff]
      %v220 = vld [vmem:[%s202 + $0x20] sm:$0xff]
      %v221 = vld [vmem:[%s202 + $0x28] sm:$0xff]
      %v222 = vld [vmem:[%s202 + $0x30] sm:$0xff]
      %v223 = vld [vmem:[%s202 + $0x38] sm:$0xff]
      %v224 = vld [vmem:[%s202 + $0x40] sm:$0xff]
      %v225 = vld [vmem:[%s202 + $0x48] sm:$0xff]
      %v226 = vld [vmem:[%s202 + $0x50] sm:$0xff]
      %v227 = vld [vmem:[%s202 + $0x58] sm:$0xff]
      %v228 = vld [vmem:[%s202 + $0x60] sm:$0xff]
      %v229 = vld [vmem:[%s202 + $0x68] sm:$0xff]
      %v230 = vld [vmem:[%s202 + $0x70] sm:$0xff]
      %v231 = vld [vmem:[%s202 + $0x78] sm:$0xff]
      %v232 = vld [vmem:[%s202 + $0x80] sm:$0xff]
      %v233 = vld [vmem:[%s202 + $0x88] sm:$0xff]
      %v234 = vld [vmem:[%s202 + $0x90] sm:$0xff]
      %v235 = vld [vmem:[%s202 + $0x98] sm:$0xff]
      %v236 = vld [vmem:[%s202 + $0xa0] sm:$0xff]
      %v237 = vld [vmem:[%s202 + $0xa8] sm:$0xff]
      %v238 = vld [vmem:[%s202 + $0xb0] sm:$0xff]
      %v239 = vld [vmem:[%s202 + $0xb8] sm:$0xff]
      %v240 = vld [vmem:[%s202 + $0xc0] sm:$0xff]
      %v241 = vld [vmem:[%s202 + $0xc8] sm:$0xff]
      %v242 = vld [vmem:[%s202 + $0xd0] sm:$0xff]
      %v243 = vld [vmem:[%s202 + $0xd8] sm:$0xff]
      %v244 = vld [vmem:[%s202 + $0xe0] sm:$0xff]
      %v245 = vld [vmem:[%s202 + $0xe8] sm:$0xff]
      %v246 = vld [vmem:[%s202 + $0xf0] sm:$0xff]
      %v247 = vld [vmem:[%s202 + $0xf8] sm:$0xff]
      %v248 = vld [vmem:[%s202 + $0x100] sm:$0xff]
      %v249 = vld [vmem:[%s202 + $0x108] sm:$0xff]
      %v250 = vld [vmem:[%s202 + $0x110] sm:$0xff]
      %v251 = vld [vmem:[%s202 + $0x118] sm:$0xff]
      %v252 = vld [vmem:[%s202 + $0x120] sm:$0xff]
      %v253 = vld [vmem:[%s202 + $0x128] sm:$0xff]
      %v254 = vld [vmem:[%s202 + $0x130] sm:$0xff]
      %v255 = vld [vmem:[%s202 + $0x138] sm:$0xff]
      %v256 = vld [vmem:[%s202 + $0x140] sm:$0xff]
      %v257 = vld [vmem:[%s202 + $0x148] sm:$0xff]
      %v258 = vld [vmem:[%s202 + $0x150] sm:$0xff]
      %v259 = vld [vmem:[%s202 + $0x158] sm:$0xff]
      %v260 = vld [vmem:[%s202 + $0x160] sm:$0xff]
      %v261 = vld [vmem:[%s202 + $0x168] sm:$0xff]
      %v262 = vld [vmem:[%s202 + $0x170] sm:$0xff]
      %v263 = vld [vmem:[%s202 + $0x178] sm:$0xff]
      %v264 = vld [vmem:[%s202 + $0x180] sm:$0xff]
      %v265 = vld [vmem:[%s202 + $0x188] sm:$0xff]
      %v266 = vld [vmem:[%s202 + $0x190] sm:$0xff]
      %v267 = vld [vmem:[%s202 + $0x198] sm:$0xff]
      %v268 = vld [vmem:[%s202 + $0x1a0] sm:$0xff]
      %v269 = vld [vmem:[%s202 + $0x1a8] sm:$0xff]
      %v270 = vld [vmem:[%s202 + $0x1b0] sm:$0xff]
      %v271 = vld [vmem:[%s202 + $0x1b8] sm:$0xff]
      %v272 = vld [vmem:[%s202 + $0x1c0] sm:$0xff]
      %v273 = vld [vmem:[%s202 + $0x1c8] sm:$0xff]
      %v274 = vld [vmem:[%s202 + $0x1d0] sm:$0xff]
      %v275 = vld [vmem:[%s202 + $0x1d8] sm:$0xff]
      %v276 = vld [vmem:[%s202 + $0x1e0] sm:$0xff]
      %v277 = vld [vmem:[%s202 + $0x1e8] sm:$0xff]
      %v278 = vld [vmem:[%s202 + $0x1f0] sm:$0xff]
      %v279 = vld [vmem:[%s202 + $0x1f8] sm:$0xff]
      %v280 = vld [vmem:[%s1] sm:$0xf]
      %v281 = vld [vmem:[%s1 + $0x4] sm:$0xf]
      %v282 = vld [vmem:[%s1 + $0x8] sm:$0xf]
      %v283 = vld [vmem:[%s1 + $0xc] sm:$0xf]
      %v284 = vld [vmem:[%s1 + $0x10] sm:$0xf]
      %v285 = vld [vmem:[%s1 + $0x14] sm:$0xf]
      %v286 = vld [vmem:[%s1 + $0x18] sm:$0xf]
      %v287 = vld [vmem:[%s1 + $0x1c] sm:$0xf]
      %v288 = vld [vmem:[%s1 + $0x20] sm:$0xf]
      %v289 = vld [vmem:[%s1 + $0x24] sm:$0xf]
      %v290 = vld [vmem:[%s1 + $0x28] sm:$0xf]
      %v291 = vld [vmem:[%s1 + $0x2c] sm:$0xf]
      %v292 = vld [vmem:[%s1 + $0x30] sm:$0xf]
      %v293 = vld [vmem:[%s1 + $0x34] sm:$0xf]
      %v294 = vld [vmem:[%s1 + $0x38] sm:$0xf]
      %v295 = vld [vmem:[%s1 + $0x3c] sm:$0xf]
      %v296 = vld [vmem:[%s1 + $0x40] sm:$0xf]
      %v297 = vld [vmem:[%s1 + $0x44] sm:$0xf]
      %v298 = vld [vmem:[%s1 + $0x48] sm:$0xf]
      %v299 = vld [vmem:[%s1 + $0x4c] sm:$0xf]
      %v300 = vld [vmem:[%s1 + $0x50] sm:$0xf]
      %v301 = vld [vmem:[%s1 + $0x54] sm:$0xf]
      %v302 = vld [vmem:[%s1 + $0x58] sm:$0xf]
      %v303 = vld [vmem:[%s1 + $0x5c] sm:$0xf]
      %v304 = vld [vmem:[%s1 + $0x60] sm:$0xf]
      %v305 = vld [vmem:[%s1 + $0x64] sm:$0xf]
      %v306 = vld [vmem:[%s1 + $0x68] sm:$0xf]
      %v307 = vld [vmem:[%s1 + $0x6c] sm:$0xf]
      %v372 = vunpack.c.l.b16 %v216
      %v373 = vunpack.c.h.b16 %v216
      %v374 = vunpack.c.l.b16 %v217
      %v375 = vunpack.c.h.b16 %v217
      %v376 = vunpack.c.l.b16 %v218
      %v377 = vunpack.c.h.b16 %v218
      %v378 = vunpack.c.l.b16 %v219
      %v379 = vunpack.c.h.b16 %v219
      %v380 = vunpack.c.l.b16 %v220
      %v381 = vunpack.c.h.b16 %v220
      %v382 = vunpack.c.l.b16 %v221
      %v383 = vunpack.c.h.b16 %v221
      %v384 = vunpack.c.l.b16 %v222
      %v385 = vunpack.c.h.b16 %v222
      %v386 = vunpack.c.l.b16 %v223
      %v387 = vunpack.c.h.b16 %v223
      %v388 = vunpack.c.l.b16 %v224
      %v389 = vunpack.c.h.b16 %v224
      %v390 = vunpack.c.l.b16 %v225
      %v391 = vunpack.c.h.b16 %v225
      %v392 = vunpack.c.l.b16 %v226
      %v393 = vunpack.c.h.b16 %v226
      %v394 = vunpack.c.l.b16 %v227
      %v395 = vunpack.c.h.b16 %v227
      %v396 = vunpack.c.l.b16 %v228
      %v397 = vunpack.c.h.b16 %v228
      %v398 = vunpack.c.l.b16 %v229
      %v399 = vunpack.c.h.b16 %v229
      %v400 = vunpack.c.l.b16 %v230
      %v401 = vunpack.c.h.b16 %v230
      %v402 = vunpack.c.l.b16 %v231
      %v403 = vunpack.c.h.b16 %v231
      %v404 = vunpack.c.l.b16 %v232
      %v405 = vunpack.c.h.b16 %v232
      %v406 = vunpack.c.l.b16 %v233
      %v407 = vunpack.c.h.b16 %v233
      %v408 = vunpack.c.l.b16 %v234
      %v409 = vunpack.c.h.b16 %v234
      %v410 = vunpack.c.l.b16 %v235
      %v411 = vunpack.c.h.b16 %v235
      %v412 = vunpack.c.l.b16 %v236
      %v413 = vunpack.c.h.b16 %v236
      %v414 = vunpack.c.l.b16 %v237
      %v415 = vunpack.c.h.b16 %v237
      %v416 = vunpack.c.l.b16 %v238
      %v417 = vunpack.c.h.b16 %v238
      %v418 = vunpack.c.l.b16 %v239
      %v419 = vunpack.c.h.b16 %v239
      %v420 = vunpack.c.l.b16 %v240
      %v421 = vunpack.c.h.b16 %v240
      %v422 = vunpack.c.l.b16 %v241
      %v423 = vunpack.c.h.b16 %v241
      %v424 = vunpack.c.l.b16 %v242
      %v425 = vunpack.c.h.b16 %v242
      %v426 = vunpack.c.l.b16 %v243
      %v427 = vunpack.c.h.b16 %v243
      %v428 = vunpack.c.l.b16 %v244
      %v429 = vunpack.c.h.b16 %v244
      %v430 = vunpack.c.l.b16 %v245
      %v431 = vunpack.c.h.b16 %v245
      %v432 = vunpack.c.l.b16 %v246
      %v433 = vunpack.c.h.b16 %v246
      %v434 = vunpack.c.l.b16 %v247
      %v435 = vunpack.c.h.b16 %v247
      %v436 = vunpack.c.l.b16 %v248
      %v437 = vunpack.c.h.b16 %v248
      %v438 = vunpack.c.l.b16 %v249
      %v439 = vunpack.c.h.b16 %v249
      %v440 = vunpack.c.l.b16 %v250
      %v441 = vunpack.c.h.b16 %v250
      %v442 = vunpack.c.l.b16 %v251
      %v443 = vunpack.c.h.b16 %v251
      %v444 = vunpack.c.l.b16 %v252
      %v445 = vunpack.c.h.b16 %v252
      %v446 = vunpack.c.l.b16 %v253
      %v447 = vunpack.c.h.b16 %v253
      %v448 = vunpack.c.l.b16 %v254
      %v449 = vunpack.c.h.b16 %v254
      %v450 = vunpack.c.l.b16 %v255
      %v451 = vunpack.c.h.b16 %v255
      %v452 = vunpack.c.l.b16 %v256
      %v453 = vunpack.c.h.b16 %v256
      %v454 = vunpack.c.l.b16 %v257
      %v455 = vunpack.c.h.b16 %v257
      %v456 = vunpack.c.l.b16 %v258
      %v457 = vunpack.c.h.b16 %v258
      %v458 = vunpack.c.l.b16 %v259
      %v459 = vunpack.c.h.b16 %v259
      %v460 = vunpack.c.l.b16 %v260
      %v461 = vunpack.c.h.b16 %v260
      %v462 = vunpack.c.l.b16 %v261
      %v463 = vunpack.c.h.b16 %v261
      %v464 = vunpack.c.l.b16 %v262
      %v465 = vunpack.c.h.b16 %v262
      %v466 = vunpack.c.l.b16 %v263
      %v467 = vunpack.c.h.b16 %v263
      %v468 = vunpack.c.l.b16 %v264
      %v469 = vunpack.c.h.b16 %v264
      %v470 = vunpack.c.l.b16 %v265
      %v471 = vunpack.c.h.b16 %v265
      %v472 = vunpack.c.l.b16 %v266
      %v473 = vunpack.c.h.b16 %v266
      %v474 = vunpack.c.l.b16 %v267
      %v475 = vunpack.c.h.b16 %v267
      %v476 = vunpack.c.l.b16 %v268
      %v477 = vunpack.c.h.b16 %v268
      %v478 = vunpack.c.l.b16 %v269
      %v479 = vunpack.c.h.b16 %v269
      %v480 = vunpack.c.l.b16 %v270
      %v481 = vunpack.c.h.b16 %v270
      %v482 = vunpack.c.l.b16 %v271
      %v483 = vunpack.c.h.b16 %v271
      %v484 = vunpack.c.l.b16 %v272
      %v485 = vunpack.c.h.b16 %v272
      %v486 = vunpack.c.l.b16 %v273
      %v487 = vunpack.c.h.b16 %v273
      %v488 = vunpack.c.l.b16 %v274
      %v489 = vunpack.c.h.b16 %v274
      %v490 = vunpack.c.l.b16 %v275
      %v491 = vunpack.c.h.b16 %v275
      %v492 = vunpack.c.l.b16 %v276
      %v493 = vunpack.c.h.b16 %v276
      %v494 = vunpack.c.l.b16 %v277
      %v495 = vunpack.c.h.b16 %v277
      %v496 = vunpack.c.l.b16 %v278
      %v497 = vunpack.c.h.b16 %v278
      %v498 = vunpack.c.l.b16 %v279
      %v499 = vunpack.c.h.b16 %v279
      %v500 = vpack.c.b16 %v374, %v372
      %v501 = vpack.c.b16 %v375, %v373
      %v502 = vpack.c.b16 %v378, %v376
      %v503 = vpack.c.b16 %v379, %v377
      %v504 = vpack.c.b16 %v382, %v380
      %v505 = vpack.c.b16 %v383, %v381
      %v506 = vpack.c.b16 %v386, %v384
      %v507 = vpack.c.b16 %v387, %v385
      %v508 = vpack.c.b16 %v390, %v388
      %v509 = vpack.c.b16 %v391, %v389
      %v510 = vpack.c.b16 %v394, %v392
      %v511 = vpack.c.b16 %v395, %v393
      %v512 = vpack.c.b16 %v398, %v396
      %v513 = vpack.c.b16 %v399, %v397
      %v514 = vpack.c.b16 %v402, %v400
      %v515 = vpack.c.b16 %v403, %v401
      %v516 = vpack.c.b16 %v406, %v404
      %v517 = vpack.c.b16 %v407, %v405
      %v518 = vpack.c.b16 %v410, %v408
      %v519 = vpack.c.b16 %v411, %v409
      %v520 = vpack.c.b16 %v414, %v412
      %v521 = vpack.c.b16 %v415, %v413
      %v522 = vpack.c.b16 %v418, %v416
      %v523 = vpack.c.b16 %v419, %v417
      %v524 = vpack.c.b16 %v422, %v420
      %v525 = vpack.c.b16 %v423, %v421
      %v526 = vpack.c.b16 %v426, %v424
      %v527 = vpack.c.b16 %v427, %v425
      %v528 = vpack.c.b16 %v430, %v428
      %v529 = vpack.c.b16 %v431, %v429
      %v530 = vpack.c.b16 %v434, %v432
      %v531 = vpack.c.b16 %v435, %v433
      %v532 = vpack.c.b16 %v438, %v436
      %v533 = vpack.c.b16 %v439, %v437
      %v534 = vpack.c.b16 %v442, %v440
      %v535 = vpack.c.b16 %v443, %v441
      %v536 = vpack.c.b16 %v446, %v444
      %v537 = vpack.c.b16 %v447, %v445
      %v538 = vpack.c.b16 %v450, %v448
      %v539 = vpack.c.b16 %v451, %v449
      %v540 = vpack.c.b16 %v454, %v452
      %v541 = vpack.c.b16 %v455, %v453
      %v542 = vpack.c.b16 %v458, %v456
      %v543 = vpack.c.b16 %v459, %v457
      %v544 = vpack.c.b16 %v462, %v460
      %v545 = vpack.c.b16 %v463, %v461
      %v546 = vpack.c.b16 %v466, %v464
      %v547 = vpack.c.b16 %v467, %v465
      %v548 = vpack.c.b16 %v470, %v468
      %v549 = vpack.c.b16 %v471, %v469
      %v550 = vpack.c.b16 %v474, %v472
      %v551 = vpack.c.b16 %v475, %v473
      %v552 = vpack.c.b16 %v478, %v476
      %v553 = vpack.c.b16 %v479, %v477
      %v554 = vpack.c.b16 %v482, %v480
      %v555 = vpack.c.b16 %v483, %v481
      %v556 = vpack.c.b16 %v486, %v484
      %v557 = vpack.c.b16 %v487, %v485
      %v558 = vpack.c.b16 %v490, %v488
      %v559 = vpack.c.b16 %v491, %v489
      %v560 = vpack.c.b16 %v494, %v492
      %v561 = vpack.c.b16 %v495, %v493
      %v562 = vpack.c.b16 %v498, %v496
      %v563 = vpack.c.b16 %v499, %v497
      %v624 = vunpack.c.l.b16 %v280
      %v625 = vunpack.c.l.b16 %v281
      %v626 = vunpack.c.l.b16 %v282
      %v627 = vunpack.c.l.b16 %v283
      %v628 = vunpack.c.l.b16 %v284
      %v629 = vunpack.c.l.b16 %v285
      %v630 = vunpack.c.l.b16 %v286
      %v631 = vunpack.c.l.b16 %v287
      %v632 = vunpack.c.l.b16 %v288
      %v633 = vunpack.c.l.b16 %v289
      %v634 = vunpack.c.l.b16 %v290
      %v635 = vunpack.c.l.b16 %v291
      %v636 = vunpack.c.l.b16 %v292
      %v637 = vunpack.c.l.b16 %v293
      %v638 = vunpack.c.l.b16 %v294
      %v639 = vunpack.c.l.b16 %v295
      %v640 = vunpack.c.l.b16 %v296
      %v641 = vunpack.c.l.b16 %v297
      %v642 = vunpack.c.l.b16 %v298
      %v643 = vunpack.c.l.b16 %v299
      %v644 = vunpack.c.l.b16 %v300
      %v645 = vunpack.c.l.b16 %v301
      %v646 = vunpack.c.l.b16 %v302
      %v647 = vunpack.c.l.b16 %v303
      %v648 = vunpack.c.l.b16 %v304
      %v649 = vunpack.c.l.b16 %v305
      %v650 = vunpack.c.l.b16 %v306
      %v651 = vunpack.c.l.b16 %v307
      %v652 = vpack.c.b16 %v625, %v624
      %v653 = vpack.c.b16 %v627, %v626
      %v654 = vpack.c.b16 %v629, %v628
      %v655 = vpack.c.b16 %v631, %v630
      %v656 = vpack.c.b16 %v633, %v632
      %v657 = vpack.c.b16 %v635, %v634
      %v658 = vpack.c.b16 %v637, %v636
      %v659 = vpack.c.b16 %v639, %v638
      %v660 = vpack.c.b16 %v641, %v640
      %v661 = vpack.c.b16 %v643, %v642
      %v662 = vpack.c.b16 %v645, %v644
      %v663 = vpack.c.b16 %v647, %v646
      %v664 = vpack.c.b16 %v649, %v648
      %v665 = vpack.c.b16 %v651, %v650
      %vm680 = vcmask 785408
      %v682 = vsel %vm680, %v501, 0
      %v685 = vsel %vm680, %v503, 0
      %v688 = vsel %vm680, %v505, 0
      %v691 = vsel %vm680, %v507, 0
      %v694 = vsel %vm680, %v509, 0
      %v697 = vsel %vm680, %v511, 0
      %v700 = vsel %vm680, %v513, 0
      %v703 = vsel %vm680, %v515, 0
      %v706 = vsel %vm680, %v517, 0
      %v709 = vsel %vm680, %v519, 0
      %v712 = vsel %vm680, %v521, 0
      %v715 = vsel %vm680, %v523, 0
      %v718 = vsel %vm680, %v525, 0
      %v721 = vsel %vm680, %v527, 0
      %v724 = vsel %vm680, %v529, 0
      %v727 = vsel %vm680, %v531, 0
      %v730 = vsel %vm680, %v533, 0
      %v733 = vsel %vm680, %v535, 0
      %v736 = vsel %vm680, %v537, 0
      %v739 = vsel %vm680, %v539, 0
      %v742 = vsel %vm680, %v541, 0
      %v745 = vsel %vm680, %v543, 0
      %v748 = vsel %vm680, %v545, 0
      %v751 = vsel %vm680, %v547, 0
      %v754 = vsel %vm680, %v549, 0
      %v757 = vsel %vm680, %v551, 0
      %v760 = vsel %vm680, %v553, 0
      %v763 = vsel %vm680, %v555, 0
      %v766 = vsel %vm680, %v557, 0
      %v769 = vsel %vm680, %v559, 0
      %v772 = vsel %vm680, %v561, 0
      %v775 = vsel %vm680, %v563, 0
      %777 = vmatprep.subr.bf16.mxu0 0
      %778 = vmatpush1.bf16.msra.mxu0 %v659
      %779 = vmatprep.subr.bf16.mxu0 0
      %780 = vmatpush1.bf16.msra.mxu0 %v658
      %781 = vmatprep.subr.bf16.mxu0 0
      %782 = vmatpush1.bf16.msra.mxu0 %v657
      %783 = vmatprep.subr.bf16.mxu0 0
      %784 = vmatpush1.bf16.msra.mxu0 %v656
      %785 = vmatprep.subr.bf16.mxu0 0
      %786 = vmatpush1.bf16.msra.mxu0 %v655
      %787 = vmatprep.subr.bf16.mxu0 0
      %788 = vmatpush1.bf16.msra.mxu0 %v654
      %789 = vmatprep.subr.bf16.mxu0 0
      %790 = vmatpush1.bf16.msra.mxu0 %v653
      %791 = vmatprep.subr.bf16.mxu0 0
      %792 = vmatpush1.bf16.msra.mxu0 %v652
      %793 = vmatprep.subr.bf16.mxu0 0
      %794 = vmatpush2.bf16.msra.mxu0 0
      %795 = vmatprep.subr.bf16.mxu0 0
      %796 = vmatpush2.bf16.msra.mxu0 0
      %797 = vmatprep.subr.bf16.mxu0 0
      %798 = vmatpush2.bf16.msra.mxu0 %v665
      %799 = vmatprep.subr.bf16.mxu0 0
      %800 = vmatpush2.bf16.msra.mxu0 %v664
      %801 = vmatprep.subr.bf16.mxu0 0
      %802 = vmatpush2.bf16.msra.mxu0 %v663
      %803 = vmatprep.subr.bf16.mxu0 0
      %804 = vmatpush2.bf16.msra.mxu0 %v662
      %805 = vmatprep.subr.bf16.mxu0 0
      %806 = vmatpush2.bf16.msra.mxu0 %v661
      %807 = vmatprep.subr.bf16.mxu0 0
      %808 = vmatpush2.bf16.msra.mxu0 %v660
      %809 = vmatprep.mubr.bf16.mxu0 %v682
      %810 = vmatmul.mubr.bf16.gmra.mxu0 %v500
      %v811 = vpop.f32.mrf.mxu0
      %v812 = vadd.f32 0.0, %v811
      %v813 = vpop.f32.mrf.mxu0
      %v814 = vpop.f32.mrf.mxu0
      %v815 = vadd.f32 0.0, %v814
      %v816 = vpop.f32.mrf.mxu0
      %817 = vmatprep.mubr.bf16.mxu0 %v685
      %818 = vmatmul.mubr.bf16.gmra.mxu0 %v502
      %v819 = vpop.f32.mrf.mxu0
      %v820 = vadd.f32 0.0, %v819
      %v821 = vpop.f32.mrf.mxu0
      %v822 = vpop.f32.mrf.mxu0
      %v823 = vadd.f32 0.0, %v822
      %v824 = vpop.f32.mrf.mxu0
      %825 = vmatprep.mubr.bf16.mxu0 %v688
      %826 = vmatmul.mubr.bf16.gmra.mxu0 %v504
      %v827 = vpop.f32.mrf.mxu0
      %v828 = vadd.f32 0.0, %v827
      %v829 = vpop.f32.mrf.mxu0
      %v830 = vpop.f32.mrf.mxu0
      %v831 = vadd.f32 0.0, %v830
      %v832 = vpop.f32.mrf.mxu0
      %833 = vmatprep.mubr.bf16.mxu0 %v691
      %834 = vmatmul.mubr.bf16.gmra.mxu0 %v506
      %v835 = vpop.f32.mrf.mxu0
      %v836 = vadd.f32 0.0, %v835
      %v837 = vpop.f32.mrf.mxu0
      %v838 = vpop.f32.mrf.mxu0
      %v839 = vadd.f32 0.0, %v838
      %v840 = vpop.f32.mrf.mxu0
      %841 = vmatprep.mubr.bf16.mxu0 %v694
      %842 = vmatmul.mubr.bf16.gmra.mxu0 %v508
      %v843 = vpop.f32.mrf.mxu0
      %v844 = vadd.f32 0.0, %v843
      %v845 = vpop.f32.mrf.mxu0
      %v846 = vpop.f32.mrf.mxu0
      %v847 = vadd.f32 0.0, %v846
      %v848 = vpop.f32.mrf.mxu0
      %849 = vmatprep.mubr.bf16.mxu0 %v697
      %850 = vmatmul.mubr.bf16.gmra.mxu0 %v510
      %v851 = vpop.f32.mrf.mxu0
      %v852 = vadd.f32 0.0, %v851
      %v853 = vpop.f32.mrf.mxu0
      %v854 = vpop.f32.mrf.mxu0
      %v855 = vadd.f32 0.0, %v854
      %v856 = vpop.f32.mrf.mxu0
      %857 = vmatprep.mubr.bf16.mxu0 %v700
      %858 = vmatmul.mubr.bf16.gmra.mxu0 %v512
      %v859 = vpop.f32.mrf.mxu0
      %v860 = vadd.f32 0.0, %v859
      %v861 = vpop.f32.mrf.mxu0
      %v862 = vpop.f32.mrf.mxu0
      %v863 = vadd.f32 0.0, %v862
      %v864 = vpop.f32.mrf.mxu0
      %865 = vmatprep.mubr.bf16.mxu0 %v703
      %866 = vmatmul.mubr.bf16.gmra.mxu0 %v514
      %v867 = vpop.f32.mrf.mxu0
      %v868 = vadd.f32 0.0, %v867
      %v869 = vpop.f32.mrf.mxu0
      %v870 = vpop.f32.mrf.mxu0
      %v871 = vadd.f32 0.0, %v870
      %v872 = vpop.f32.mrf.mxu0
      %873 = vmatprep.mubr.bf16.mxu0 %v706
      %874 = vmatmul.mubr.bf16.gmra.mxu0 %v516
      %v875 = vpop.f32.mrf.mxu0
      %v876 = vadd.f32 0.0, %v875
      %v877 = vpop.f32.mrf.mxu0
      %v878 = vpop.f32.mrf.mxu0
      %v879 = vadd.f32 0.0, %v878
      %v880 = vpop.f32.mrf.mxu0
      %881 = vmatprep.mubr.bf16.mxu0 %v709
      %882 = vmatmul.mubr.bf16.gmra.mxu0 %v518
      %v883 = vpop.f32.mrf.mxu0
      %v884 = vadd.f32 0.0, %v883
      %v885 = vpop.f32.mrf.mxu0
      %v886 = vpop.f32.mrf.mxu0
      %v887 = vadd.f32 0.0, %v886
      %v888 = vpop.f32.mrf.mxu0
      %889 = vmatprep.mubr.bf16.mxu0 %v712
      %890 = vmatmul.mubr.bf16.gmra.mxu0 %v520
      %v891 = vpop.f32.mrf.mxu0
      %v892 = vadd.f32 0.0, %v891
      %v893 = vpop.f32.mrf.mxu0
      %v894 = vpop.f32.mrf.mxu0
      %v895 = vadd.f32 0.0, %v894
      %v896 = vpop.f32.mrf.mxu0
      %897 = vmatprep.mubr.bf16.mxu0 %v715
      %898 = vmatmul.mubr.bf16.gmra.mxu0 %v522
      %v899 = vpop.f32.mrf.mxu0
      %v900 = vadd.f32 0.0, %v899
      %v901 = vpop.f32.mrf.mxu0
      %v902 = vpop.f32.mrf.mxu0
      %v903 = vadd.f32 0.0, %v902
      %v904 = vpop.f32.mrf.mxu0
      %905 = vmatprep.mubr.bf16.mxu0 %v718
      %906 = vmatmul.mubr.bf16.gmra.mxu0 %v524
      %v907 = vpop.f32.mrf.mxu0
      %v908 = vadd.f32 0.0, %v907
      %v909 = vpop.f32.mrf.mxu0
      %v910 = vpop.f32.mrf.mxu0
      %v911 = vadd.f32 0.0, %v910
      %v912 = vpop.f32.mrf.mxu0
      %913 = vmatprep.mubr.bf16.mxu0 %v721
      %914 = vmatmul.mubr.bf16.gmra.mxu0 %v526
      %v915 = vpop.f32.mrf.mxu0
      %v916 = vadd.f32 0.0, %v915
      %v917 = vpop.f32.mrf.mxu0
      %v918 = vpop.f32.mrf.mxu0
      %v919 = vadd.f32 0.0, %v918
      %v920 = vpop.f32.mrf.mxu0
      %921 = vmatprep.mubr.bf16.mxu0 %v724
      %922 = vmatmul.mubr.bf16.gmra.mxu0 %v528
      %v923 = vpop.f32.mrf.mxu0
      %v924 = vadd.f32 0.0, %v923
      %v925 = vpop.f32.mrf.mxu0
      %v926 = vpop.f32.mrf.mxu0
      %v927 = vadd.f32 0.0, %v926
      %v928 = vpop.f32.mrf.mxu0
      %929 = vmatprep.mubr.bf16.mxu0 %v727
      %930 = vmatmul.mubr.bf16.gmra.mxu0 %v530
      %v931 = vpop.f32.mrf.mxu0
      %v932 = vadd.f32 0.0, %v931
      %v933 = vpop.f32.mrf.mxu0
      %v934 = vpop.f32.mrf.mxu0
      %v935 = vadd.f32 0.0, %v934
      %v936 = vpop.f32.mrf.mxu0
      %937 = vmatprep.mubr.bf16.mxu0 %v730
      %938 = vmatmul.mubr.bf16.gmra.mxu0 %v532
      %v939 = vpop.f32.mrf.mxu0
      %v940 = vadd.f32 0.0, %v939
      %v941 = vpop.f32.mrf.mxu0
      %v942 = vpop.f32.mrf.mxu0
      %v943 = vadd.f32 0.0, %v942
      %v944 = vpop.f32.mrf.mxu0
      %945 = vmatprep.mubr.bf16.mxu0 %v733
      %946 = vmatmul.mubr.bf16.gmra.mxu0 %v534
      %v947 = vpop.f32.mrf.mxu0
      %v948 = vadd.f32 0.0, %v947
      %v949 = vpop.f32.mrf.mxu0
      %v950 = vpop.f32.mrf.mxu0
      %v951 = vadd.f32 0.0, %v950
      %v952 = vpop.f32.mrf.mxu0
      %953 = vmatprep.mubr.bf16.mxu0 %v736
      %954 = vmatmul.mubr.bf16.gmra.mxu0 %v536
      %v955 = vpop.f32.mrf.mxu0
      %v956 = vadd.f32 0.0, %v955
      %v957 = vpop.f32.mrf.mxu0
      %v958 = vpop.f32.mrf.mxu0
      %v959 = vadd.f32 0.0, %v958
      %v960 = vpop.f32.mrf.mxu0
      %961 = vmatprep.mubr.bf16.mxu0 %v739
      %962 = vmatmul.mubr.bf16.gmra.mxu0 %v538
      %v963 = vpop.f32.mrf.mxu0
      %v964 = vadd.f32 0.0, %v963
      %v965 = vpop.f32.mrf.mxu0
      %v966 = vpop.f32.mrf.mxu0
      %v967 = vadd.f32 0.0, %v966
      %v968 = vpop.f32.mrf.mxu0
      %969 = vmatprep.mubr.bf16.mxu0 %v742
      %970 = vmatmul.mubr.bf16.gmra.mxu0 %v540
      %v971 = vpop.f32.mrf.mxu0
      %v972 = vadd.f32 0.0, %v971
      %v973 = vpop.f32.mrf.mxu0
      %v974 = vpop.f32.mrf.mxu0
      %v975 = vadd.f32 0.0, %v974
      %v976 = vpop.f32.mrf.mxu0
      %977 = vmatprep.mubr.bf16.mxu0 %v745
      %978 = vmatmul.mubr.bf16.gmra.mxu0 %v542
      %v979 = vpop.f32.mrf.mxu0
      %v980 = vadd.f32 0.0, %v979
      %v981 = vpop.f32.mrf.mxu0
      %v982 = vpop.f32.mrf.mxu0
      %v983 = vadd.f32 0.0, %v982
      %v984 = vpop.f32.mrf.mxu0
      %985 = vmatprep.mubr.bf16.mxu0 %v748
      %986 = vmatmul.mubr.bf16.gmra.mxu0 %v544
      %v987 = vpop.f32.mrf.mxu0
      %v988 = vadd.f32 0.0, %v987
      %v989 = vpop.f32.mrf.mxu0
      %v990 = vpop.f32.mrf.mxu0
      %v991 = vadd.f32 0.0, %v990
      %v992 = vpop.f32.mrf.mxu0
      %993 = vmatprep.mubr.bf16.mxu0 %v751
      %994 = vmatmul.mubr.bf16.gmra.mxu0 %v546
      %v995 = vpop.f32.mrf.mxu0
      %v996 = vadd.f32 0.0, %v995
      %v997 = vpop.f32.mrf.mxu0
      %v998 = vpop.f32.mrf.mxu0
      %v999 = vadd.f32 0.0, %v998
      %v1000 = vpop.f32.mrf.mxu0
      %1001 = vmatprep.mubr.bf16.mxu0 %v754
      %1002 = vmatmul.mubr.bf16.gmra.mxu0 %v548
      %v1003 = vpop.f32.mrf.mxu0
      %v1004 = vadd.f32 0.0, %v1003
      %v1005 = vpop.f32.mrf.mxu0
      %v1006 = vpop.f32.mrf.mxu0
      %v1007 = vadd.f32 0.0, %v1006
      %v1008 = vpop.f32.mrf.mxu0
      %1009 = vmatprep.mubr.bf16.mxu0 %v757
      %1010 = vmatmul.mubr.bf16.gmra.mxu0 %v550
      %v1011 = vpop.f32.mrf.mxu0
      %v1012 = vadd.f32 0.0, %v1011
      %v1013 = vpop.f32.mrf.mxu0
      %v1014 = vpop.f32.mrf.mxu0
      %v1015 = vadd.f32 0.0, %v1014
      %v1016 = vpop.f32.mrf.mxu0
      %1017 = vmatprep.mubr.bf16.mxu0 %v760
      %1018 = vmatmul.mubr.bf16.gmra.mxu0 %v552
      %v1019 = vpop.f32.mrf.mxu0
      %v1020 = vadd.f32 0.0, %v1019
      %v1021 = vpop.f32.mrf.mxu0
      %v1022 = vpop.f32.mrf.mxu0
      %v1023 = vadd.f32 0.0, %v1022
      %v1024 = vpop.f32.mrf.mxu0
      %1025 = vmatprep.mubr.bf16.mxu0 %v763
      %1026 = vmatmul.mubr.bf16.gmra.mxu0 %v554
      %v1027 = vpop.f32.mrf.mxu0
      %v1028 = vadd.f32 0.0, %v1027
      %v1029 = vpop.f32.mrf.mxu0
      %v1030 = vpop.f32.mrf.mxu0
      %v1031 = vadd.f32 0.0, %v1030
      %v1032 = vpop.f32.mrf.mxu0
      %1033 = vmatprep.mubr.bf16.mxu0 %v766
      %1034 = vmatmul.mubr.bf16.gmra.mxu0 %v556
      %v1035 = vpop.f32.mrf.mxu0
      %v1036 = vadd.f32 0.0, %v1035
      %v1037 = vpop.f32.mrf.mxu0
      %v1038 = vpop.f32.mrf.mxu0
      %v1039 = vadd.f32 0.0, %v1038
      %v1040 = vpop.f32.mrf.mxu0
      %1041 = vmatprep.mubr.bf16.mxu0 %v769
      %1042 = vmatmul.mubr.bf16.gmra.mxu0 %v558
      %v1043 = vpop.f32.mrf.mxu0
      %v1044 = vadd.f32 0.0, %v1043
      %v1045 = vpop.f32.mrf.mxu0
      %v1046 = vpop.f32.mrf.mxu0
      %v1047 = vadd.f32 0.0, %v1046
      %v1048 = vpop.f32.mrf.mxu0
      %1049 = vmatprep.mubr.bf16.mxu0 %v772
      %1050 = vmatmul.mubr.bf16.gmra.mxu0 %v560
      %v1051 = vpop.f32.mrf.mxu0
      %v1052 = vadd.f32 0.0, %v1051
      %v1053 = vpop.f32.mrf.mxu0
      %v1054 = vpop.f32.mrf.mxu0
      %v1055 = vadd.f32 0.0, %v1054
      %v1056 = vpop.f32.mrf.mxu0
      %1057 = vmatprep.mubr.bf16.mxu0 %v775
      %1058 = vmatmul.mubr.bf16.gmra.mxu0 %v562
      %v1059 = vpop.f32.mrf.mxu0
      %v1060 = vadd.f32 0.0, %v1059
      %v1061 = vpop.f32.mrf.mxu0
      %v1062 = vpop.f32.mrf.mxu0
      %v1063 = vadd.f32 0.0, %v1062
      %v1064 = vpop.f32.mrf.mxu0
      %1065 = vdwg.mxu0
      %v1066 = vld [vmem:[%s2] sm:$0x1]
      %v1067 = vlaneseq
      %v1068 = vshrl.u32 %v1067, 7
      %v1069 = vsub.s32 0, %v1068
      %v1070 = vrot.slane %v1066, %v1069
      %v1071 = vmul.f32 %v812, %v1070
      %v1072 = vmul.f32 %v815, %v1070
      %v1073 = vmul.f32 %v820, %v1070
      %v1074 = vmul.f32 %v823, %v1070
      %v1075 = vmul.f32 %v828, %v1070
      %v1076 = vmul.f32 %v831, %v1070
      %v1077 = vmul.f32 %v836, %v1070
      %v1078 = vmul.f32 %v839, %v1070
      %v1079 = vmul.f32 %v844, %v1070
      %v1080 = vmul.f32 %v847, %v1070
      %v1081 = vmul.f32 %v852, %v1070
      %v1082 = vmul.f32 %v855, %v1070
      %v1083 = vmul.f32 %v860, %v1070
      %v1084 = vmul.f32 %v863, %v1070
      %v1085 = vmul.f32 %v868, %v1070
      %v1086 = vmul.f32 %v871, %v1070
      %v1087 = vmul.f32 %v876, %v1070
      %v1088 = vmul.f32 %v879, %v1070
      %v1089 = vmul.f32 %v884, %v1070
      %v1090 = vmul.f32 %v887, %v1070
      %v1091 = vmul.f32 %v892, %v1070
      %v1092 = vmul.f32 %v895, %v1070
      %v1093 = vmul.f32 %v900, %v1070
      %v1094 = vmul.f32 %v903, %v1070
      %v1095 = vmul.f32 %v908, %v1070
      %v1096 = vmul.f32 %v911, %v1070
      %v1097 = vmul.f32 %v916, %v1070
      %v1098 = vmul.f32 %v919, %v1070
      %v1099 = vmul.f32 %v924, %v1070
      %v1100 = vmul.f32 %v927, %v1070
      %v1101 = vmul.f32 %v932, %v1070
      %v1102 = vmul.f32 %v935, %v1070
      %v1103 = vmul.f32 %v940, %v1070
      %v1104 = vmul.f32 %v943, %v1070
      %v1105 = vmul.f32 %v948, %v1070
      %v1106 = vmul.f32 %v951, %v1070
      %v1107 = vmul.f32 %v956, %v1070
      %v1108 = vmul.f32 %v959, %v1070
      %v1109 = vmul.f32 %v964, %v1070
      %v1110 = vmul.f32 %v967, %v1070
      %v1111 = vmul.f32 %v972, %v1070
      %v1112 = vmul.f32 %v975, %v1070
      %v1113 = vmul.f32 %v980, %v1070
      %v1114 = vmul.f32 %v983, %v1070
      %v1115 = vmul.f32 %v988, %v1070
      %v1116 = vmul.f32 %v991, %v1070
      %v1117 = vmul.f32 %v996, %v1070
      %v1118 = vmul.f32 %v999, %v1070
      %v1119 = vmul.f32 %v1004, %v1070
      %v1120 = vmul.f32 %v1007, %v1070
      %v1121 = vmul.f32 %v1012, %v1070
      %v1122 = vmul.f32 %v1015, %v1070
      %v1123 = vmul.f32 %v1020, %v1070
      %v1124 = vmul.f32 %v1023, %v1070
      %v1125 = vmul.f32 %v1028, %v1070
      %v1126 = vmul.f32 %v1031, %v1070
      %v1127 = vmul.f32 %v1036, %v1070
      %v1128 = vmul.f32 %v1039, %v1070
      %v1129 = vmul.f32 %v1044, %v1070
      %v1130 = vmul.f32 %v1047, %v1070
      %v1131 = vmul.f32 %v1052, %v1070
      %v1132 = vmul.f32 %v1055, %v1070
      %v1133 = vmul.f32 %v1060, %v1070
      %v1134 = vmul.f32 %v1063, %v1070
      %v1135 = vld [vmem:[%s2 + $0x1] sm:$0x1]
      %v1136 = vlaneseq
      %v1137 = vshrl.u32 %v1136, 7
      %v1138 = vsub.s32 0, %v1137
      %v1139 = vrot.slane %v1135, %v1138
      %v1140 = vadd.f32 %v1071, %v1139
      %v1141 = vadd.f32 %v1072, %v1139
      %v1142 = vadd.f32 %v1073, %v1139
      %v1143 = vadd.f32 %v1074, %v1139
      %v1144 = vadd.f32 %v1075, %v1139
      %v1145 = vadd.f32 %v1076, %v1139
      %v1146 = vadd.f32 %v1077, %v1139
      %v1147 = vadd.f32 %v1078, %v1139
      %v1148 = vadd.f32 %v1079, %v1139
      %v1149 = vadd.f32 %v1080, %v1139
      %v1150 = vadd.f32 %v1081, %v1139
      %v1151 = vadd.f32 %v1082, %v1139
      %v1152 = vadd.f32 %v1083, %v1139
      %v1153 = vadd.f32 %v1084, %v1139
      %v1154 = vadd.f32 %v1085, %v1139
      %v1155 = vadd.f32 %v1086, %v1139
      %v1156 = vadd.f32 %v1087, %v1139
      %v1157 = vadd.f32 %v1088, %v1139
      %v1158 = vadd.f32 %v1089, %v1139
      %v1159 = vadd.f32 %v1090, %v1139
      %v1160 = vadd.f32 %v1091, %v1139
      %v1161 = vadd.f32 %v1092, %v1139
      %v1162 = vadd.f32 %v1093, %v1139
      %v1163 = vadd.f32 %v1094, %v1139
      %v1164 = vadd.f32 %v1095, %v1139
      %v1165 = vadd.f32 %v1096, %v1139
      %v1166 = vadd.f32 %v1097, %v1139
      %v1167 = vadd.f32 %v1098, %v1139
      %v1168 = vadd.f32 %v1099, %v1139
      %v1169 = vadd.f32 %v1100, %v1139
      %v1170 = vadd.f32 %v1101, %v1139
      %v1171 = vadd.f32 %v1102, %v1139
      %v1172 = vadd.f32 %v1103, %v1139
      %v1173 = vadd.f32 %v1104, %v1139
      %v1174 = vadd.f32 %v1105, %v1139
      %v1175 = vadd.f32 %v1106, %v1139
      %v1176 = vadd.f32 %v1107, %v1139
      %v1177 = vadd.f32 %v1108, %v1139
      %v1178 = vadd.f32 %v1109, %v1139
      %v1179 = vadd.f32 %v1110, %v1139
      %v1180 = vadd.f32 %v1111, %v1139
      %v1181 = vadd.f32 %v1112, %v1139
      %v1182 = vadd.f32 %v1113, %v1139
      %v1183 = vadd.f32 %v1114, %v1139
      %v1184 = vadd.f32 %v1115, %v1139
      %v1185 = vadd.f32 %v1116, %v1139
      %v1186 = vadd.f32 %v1117, %v1139
      %v1187 = vadd.f32 %v1118, %v1139
      %v1188 = vadd.f32 %v1119, %v1139
      %v1189 = vadd.f32 %v1120, %v1139
      %v1190 = vadd.f32 %v1121, %v1139
      %v1191 = vadd.f32 %v1122, %v1139
      %v1192 = vadd.f32 %v1123, %v1139
      %v1193 = vadd.f32 %v1124, %v1139
      %v1194 = vadd.f32 %v1125, %v1139
      %v1195 = vadd.f32 %v1126, %v1139
      %v1196 = vadd.f32 %v1127, %v1139
      %v1197 = vadd.f32 %v1128, %v1139
      %v1198 = vadd.f32 %v1129, %v1139
      %v1199 = vadd.f32 %v1130, %v1139
      %v1200 = vadd.f32 %v1131, %v1139
      %v1201 = vadd.f32 %v1132, %v1139
      %v1202 = vadd.f32 %v1133, %v1139
      %v1203 = vadd.f32 %v1134, %v1139
      %v1204 = vmul.f32 %v1140, 0.01
      %v1205 = vmul.f32 %v1141, 0.01
      %v1206 = vmul.f32 %v1142, 0.01
      %v1207 = vmul.f32 %v1143, 0.01
      %v1208 = vmul.f32 %v1144, 0.01
      %v1209 = vmul.f32 %v1145, 0.01
      %v1210 = vmul.f32 %v1146, 0.01
      %v1211 = vmul.f32 %v1147, 0.01
      %v1212 = vmul.f32 %v1148, 0.01
      %v1213 = vmul.f32 %v1149, 0.01
      %v1214 = vmul.f32 %v1150, 0.01
      %v1215 = vmul.f32 %v1151, 0.01
      %v1216 = vmul.f32 %v1152, 0.01
      %v1217 = vmul.f32 %v1153, 0.01
      %v1218 = vmul.f32 %v1154, 0.01
      %v1219 = vmul.f32 %v1155, 0.01
      %v1220 = vmul.f32 %v1156, 0.01
      %v1221 = vmul.f32 %v1157, 0.01
      %v1222 = vmul.f32 %v1158, 0.01
      %v1223 = vmul.f32 %v1159, 0.01
      %v1224 = vmul.f32 %v1160, 0.01
      %v1225 = vmul.f32 %v1161, 0.01
      %v1226 = vmul.f32 %v1162, 0.01
      %v1227 = vmul.f32 %v1163, 0.01
      %v1228 = vmul.f32 %v1164, 0.01
      %v1229 = vmul.f32 %v1165, 0.01
      %v1230 = vmul.f32 %v1166, 0.01
      %v1231 = vmul.f32 %v1167, 0.01
      %v1232 = vmul.f32 %v1168, 0.01
      %v1233 = vmul.f32 %v1169, 0.01
      %v1234 = vmul.f32 %v1170, 0.01
      %v1235 = vmul.f32 %v1171, 0.01
      %v1236 = vmul.f32 %v1172, 0.01
      %v1237 = vmul.f32 %v1173, 0.01
      %v1238 = vmul.f32 %v1174, 0.01
      %v1239 = vmul.f32 %v1175, 0.01
      %v1240 = vmul.f32 %v1176, 0.01
      %v1241 = vmul.f32 %v1177, 0.01
      %v1242 = vmul.f32 %v1178, 0.01
      %v1243 = vmul.f32 %v1179, 0.01
      %v1244 = vmul.f32 %v1180, 0.01
      %v1245 = vmul.f32 %v1181, 0.01
      %v1246 = vmul.f32 %v1182, 0.01
      %v1247 = vmul.f32 %v1183, 0.01
      %v1248 = vmul.f32 %v1184, 0.01
      %v1249 = vmul.f32 %v1185, 0.01
      %v1250 = vmul.f32 %v1186, 0.01
      %v1251 = vmul.f32 %v1187, 0.01
      %v1252 = vmul.f32 %v1188, 0.01
      %v1253 = vmul.f32 %v1189, 0.01
      %v1254 = vmul.f32 %v1190, 0.01
      %v1255 = vmul.f32 %v1191, 0.01
      %v1256 = vmul.f32 %v1192, 0.01
      %v1257 = vmul.f32 %v1193, 0.01
      %v1258 = vmul.f32 %v1194, 0.01
      %v1259 = vmul.f32 %v1195, 0.01
      %v1260 = vmul.f32 %v1196, 0.01
      %v1261 = vmul.f32 %v1197, 0.01
      %v1262 = vmul.f32 %v1198, 0.01
      %v1263 = vmul.f32 %v1199, 0.01
      %v1264 = vmul.f32 %v1200, 0.01
      %v1265 = vmul.f32 %v1201, 0.01
      %v1266 = vmul.f32 %v1202, 0.01
      %v1267 = vmul.f32 %v1203, 0.01
      %v1268 = vmax.f32 %v1140, %v1204
      %v1269 = vmax.f32 %v1141, %v1205
      %v1270 = vmax.f32 %v1142, %v1206
      %v1271 = vmax.f32 %v1143, %v1207
      %v1272 = vmax.f32 %v1144, %v1208
      %v1273 = vmax.f32 %v1145, %v1209
      %v1274 = vmax.f32 %v1146, %v1210
      %v1275 = vmax.f32 %v1147, %v1211
      %v1276 = vmax.f32 %v1148, %v1212
      %v1277 = vmax.f32 %v1149, %v1213
      %v1278 = vmax.f32 %v1150, %v1214
      %v1279 = vmax.f32 %v1151, %v1215
      %v1280 = vmax.f32 %v1152, %v1216
      %v1281 = vmax.f32 %v1153, %v1217
      %v1282 = vmax.f32 %v1154, %v1218
      %v1283 = vmax.f32 %v1155, %v1219
      %v1284 = vmax.f32 %v1156, %v1220
      %v1285 = vmax.f32 %v1157, %v1221
      %v1286 = vmax.f32 %v1158, %v1222
      %v1287 = vmax.f32 %v1159, %v1223
      %v1288 = vmax.f32 %v1160, %v1224
      %v1289 = vmax.f32 %v1161, %v1225
      %v1290 = vmax.f32 %v1162, %v1226
      %v1291 = vmax.f32 %v1163, %v1227
      %v1292 = vmax.f32 %v1164, %v1228
      %v1293 = vmax.f32 %v1165, %v1229
      %v1294 = vmax.f32 %v1166, %v1230
      %v1295 = vmax.f32 %v1167, %v1231
      %v1296 = vmax.f32 %v1168, %v1232
      %v1297 = vmax.f32 %v1169, %v1233
      %v1298 = vmax.f32 %v1170, %v1234
      %v1299 = vmax.f32 %v1171, %v1235
      %v1300 = vmax.f32 %v1172, %v1236
      %v1301 = vmax.f32 %v1173, %v1237
      %v1302 = vmax.f32 %v1174, %v1238
      %v1303 = vmax.f32 %v1175, %v1239
      %v1304 = vmax.f32 %v1176, %v1240
      %v1305 = vmax.f32 %v1177, %v1241
      %v1306 = vmax.f32 %v1178, %v1242
      %v1307 = vmax.f32 %v1179, %v1243
      %v1308 = vmax.f32 %v1180, %v1244
      %v1309 = vmax.f32 %v1181, %v1245
      %v1310 = vmax.f32 %v1182, %v1246
      %v1311 = vmax.f32 %v1183, %v1247
      %v1312 = vmax.f32 %v1184, %v1248
      %v1313 = vmax.f32 %v1185, %v1249
      %v1314 = vmax.f32 %v1186, %v1250
      %v1315 = vmax.f32 %v1187, %v1251
      %v1316 = vmax.f32 %v1188, %v1252
      %v1317 = vmax.f32 %v1189, %v1253
      %v1318 = vmax.f32 %v1190, %v1254
      %v1319 = vmax.f32 %v1191, %v1255
      %v1320 = vmax.f32 %v1192, %v1256
      %v1321 = vmax.f32 %v1193, %v1257
      %v1322 = vmax.f32 %v1194, %v1258
      %v1323 = vmax.f32 %v1195, %v1259
      %v1324 = vmax.f32 %v1196, %v1260
      %v1325 = vmax.f32 %v1197, %v1261
      %v1326 = vmax.f32 %v1198, %v1262
      %v1327 = vmax.f32 %v1199, %v1263
      %v1328 = vmax.f32 %v1200, %v1264
      %v1329 = vmax.f32 %v1201, %v1265
      %v1330 = vmax.f32 %v1202, %v1266
      %v1331 = vmax.f32 %v1203, %v1267
      %1332 = vst [vmem:[%s213] sm:$0xff] %v1268
      %1333 = vst [vmem:[%s213 + $0x8] sm:$0xff] %v1269
      %1334 = vst [vmem:[%s213 + $0x10] sm:$0xff] %v1270
      %1335 = vst [vmem:[%s213 + $0x18] sm:$0xff] %v1271
      %1336 = vst [vmem:[%s213 + $0x20] sm:$0xff] %v1272
      %1337 = vst [vmem:[%s213 + $0x28] sm:$0xff] %v1273
      %1338 = vst [vmem:[%s213 + $0x30] sm:$0xff] %v1274
      %1339 = vst [vmem:[%s213 + $0x38] sm:$0xff] %v1275
      %1340 = vst [vmem:[%s213 + $0x40] sm:$0xff] %v1276
      %1341 = vst [vmem:[%s213 + $0x48] sm:$0xff] %v1277
      %1342 = vst [vmem:[%s213 + $0x50] sm:$0xff] %v1278
      %1343 = vst [vmem:[%s213 + $0x58] sm:$0xff] %v1279
      %1344 = vst [vmem:[%s213 + $0x60] sm:$0xff] %v1280
      %1345 = vst [vmem:[%s213 + $0x68] sm:$0xff] %v1281
      %1346 = vst [vmem:[%s213 + $0x70] sm:$0xff] %v1282
      %1347 = vst [vmem:[%s213 + $0x78] sm:$0xff] %v1283
      %1348 = vst [vmem:[%s213 + $0x80] sm:$0xff] %v1284
      %1349 = vst [vmem:[%s213 + $0x88] sm:$0xff] %v1285
      %1350 = vst [vmem:[%s213 + $0x90] sm:$0xff] %v1286
      %1351 = vst [vmem:[%s213 + $0x98] sm:$0xff] %v1287
      %1352 = vst [vmem:[%s213 + $0xa0] sm:$0xff] %v1288
      %1353 = vst [vmem:[%s213 + $0xa8] sm:$0xff] %v1289
      %1354 = vst [vmem:[%s213 + $0xb0] sm:$0xff] %v1290
      %1355 = vst [vmem:[%s213 + $0xb8] sm:$0xff] %v1291
      %1356 = vst [vmem:[%s213 + $0xc0] sm:$0xff] %v1292
      %1357 = vst [vmem:[%s213 + $0xc8] sm:$0xff] %v1293
      %1358 = vst [vmem:[%s213 + $0xd0] sm:$0xff] %v1294
      %1359 = vst [vmem:[%s213 + $0xd8] sm:$0xff] %v1295
      %1360 = vst [vmem:[%s213 + $0xe0] sm:$0xff] %v1296
      %1361 = vst [vmem:[%s213 + $0xe8] sm:$0xff] %v1297
      %1362 = vst [vmem:[%s213 + $0xf0] sm:$0xff] %v1298
      %1363 = vst [vmem:[%s213 + $0xf8] sm:$0xff] %v1299
      %1364 = vst [vmem:[%s213 + $0x100] sm:$0xff] %v1300
      %1365 = vst [vmem:[%s213 + $0x108] sm:$0xff] %v1301
      %1366 = vst [vmem:[%s213 + $0x110] sm:$0xff] %v1302
      %1367 = vst [vmem:[%s213 + $0x118] sm:$0xff] %v1303
      %1368 = vst [vmem:[%s213 + $0x120] sm:$0xff] %v1304
      %1369 = vst [vmem:[%s213 + $0x128] sm:$0xff] %v1305
      %1370 = vst [vmem:[%s213 + $0x130] sm:$0xff] %v1306
      %1371 = vst [vmem:[%s213 + $0x138] sm:$0xff] %v1307
      %1372 = vst [vmem:[%s213 + $0x140] sm:$0xff] %v1308
      %1373 = vst [vmem:[%s213 + $0x148] sm:$0xff] %v1309
      %1374 = vst [vmem:[%s213 + $0x150] sm:$0xff] %v1310
      %1375 = vst [vmem:[%s213 + $0x158] sm:$0xff] %v1311
      %1376 = vst [vmem:[%s213 + $0x160] sm:$0xff] %v1312
      %1377 = vst [vmem:[%s213 + $0x168] sm:$0xff] %v1313
      %1378 = vst [vmem:[%s213 + $0x170] sm:$0xff] %v1314
      %1379 = vst [vmem:[%s213 + $0x178] sm:$0xff] %v1315
      %1380 = vst [vmem:[%s213 + $0x180] sm:$0xff] %v1316
      %1381 = vst [vmem:[%s213 + $0x188] sm:$0xff] %v1317
      %1382 = vst [vmem:[%s213 + $0x190] sm:$0xff] %v1318
      %1383 = vst [vmem:[%s213 + $0x198] sm:$0xff] %v1319
      %1384 = vst [vmem:[%s213 + $0x1a0] sm:$0xff] %v1320
      %1385 = vst [vmem:[%s213 + $0x1a8] sm:$0xff] %v1321
      %1386 = vst [vmem:[%s213 + $0x1b0] sm:$0xff] %v1322
      %1387 = vst [vmem:[%s213 + $0x1b8] sm:$0xff] %v1323
      %1388 = vst [vmem:[%s213 + $0x1c0] sm:$0xff] %v1324
      %1389 = vst [vmem:[%s213 + $0x1c8] sm:$0xff] %v1325
      %1390 = vst [vmem:[%s213 + $0x1d0] sm:$0xff] %v1326
      %1391 = vst [vmem:[%s213 + $0x1d8] sm:$0xff] %v1327
      %1392 = vst [vmem:[%s213 + $0x1e0] sm:$0xff] %v1328
      %1393 = vst [vmem:[%s213 + $0x1e8] sm:$0xff] %v1329
      %1394 = vst [vmem:[%s213 + $0x1f0] sm:$0xff] %v1330
      %1395 = vst [vmem:[%s213 + $0x1f8] sm:$0xff] %v1331
      %s1396 = smul.u32 8, %s19
      %p1397 = scmp.lt.s32.totalorder %s18, 1
      %s1398 = scalar_select %p1397, %s18, 1
      %p1399 = scmp.lt.s32.totalorder %s1396, 7
      %s1400 = scalar_select %p1399, %s1396, 7
      %s1401 = smul.addr %s1400, 8
      %s1402 = smul.addr %s1398, 64
      %s1403 = sadd.s32 %s1401, %s1402
      %s1404 = smul.addr %s1403, 8
      %s1405 = scalar_lea.vmem %s3, %s1404
      // Predicated region
      $region33: #{conv_block_forward.3} parent=31 // pred_check
        %p1406 = pneg %p116
      $region34: #{conv_block_forward.3} parent=31 // pred_check_branch
        %1408 = sbr.rel (%p1406) target = $region36
      $region35: #{conv_block_forward.3} parent=31 // pred_region
        %s1409 = smul.u32 8, %s19
      $region36: #{conv_block_forward.3} parent=31 // pred_fallthru
        _
    $region32: #{conv_block_forward.3} parent=5 // pred_fallthru
      _
    %p1410 = scmp.le.s32.totalorder 2, %s9
    // Predicated region
    $region37: #{conv_block_forward.3} parent=5 // pred_check
      %p1411 = pneg %p1410
    $region38: #{conv_block_forward.3} parent=5 // pred_check_branch
      %1413 = sbr.rel (%p1411) target = $region40
    $region39: #{conv_block_forward.3} parent=5 // pred_region
      %s1414 = ssub.s32 %s9, 2
      // Predicated region
      $region41: #{conv_block_forward.3} parent=39 // pred_check
        %p1415 = pneg %p122
      $region42: #{conv_block_forward.3} parent=39 // pred_check_branch
        %1417 = sbr.rel (%p1415) target = $region44
      $region43: #{conv_block_forward.3} parent=39 // pred_region
        %s1418 = smul.u32 8, %s21
        %p1419 = scmp.lt.s32.totalorder %s20, 1
        %s1420 = scalar_select %p1419, %s20, 1
        %p1421 = scmp.lt.s32.totalorder %s1418, 7
        %s1422 = scalar_select %p1421, %s1418, 7
        %s1423 = smul.addr %s1422, 8
        %s1424 = smul.addr %s1420, 64
        %s1425 = sadd.s32 %s1423, %s1424
        %s1426 = smul.addr %s1425, 8
        %s1427 = scalar_lea.vmem %s3, %s1426
      $region44: #{conv_block_forward.3} parent=39 // pred_fallthru
        _
    $region40: #{conv_block_forward.3} parent=5 // pred_fallthru
      _
  $region6: #{conv_block_forward.3} parent=0 // loop_footer
    %s13 = sadd.s32 1, %s9
  $region7: #{conv_block_forward.3} parent=0 // loop_footer_branch
    %8 = sbr.rel target = $region3
  $region8: #{conv_block_forward.3} parent=0 // loop_exit
    _

</llo_original>
